<compile_context>
chip_gen: v7x
topology: tpu7x:2x2x1
jax: 0.10.0
libtpu: 0.0.40
codegen_flags: <defaults>
</compile_context>

<pallas_src>
import numpy as np
import jax
import jax.numpy as jnp
from jax.experimental import pallas as pl
from jax.experimental.pallas import tpu as pltpu

LOG2PI = float(np.log(2.0 * np.pi))


def _log_sigmoid(z):
    # stable log(sigmoid(z)) = -softplus(-z); only exp/log/abs/max -> lowers cleanly.
    return -(jnp.maximum(-z, 0.0) + jnp.log(1.0 + jnp.exp(-jnp.abs(z))))


def glow1d_step_kernel(x1_ref, x2_ref, ascale_ref, abias_ref, W_ref,
                       W1_ref, b1_ref, W2_ref, b2_ref,
                       out_ref, x1_sc, x2_sc, acc_sc):
    """One flow step per grid iteration; Fx and the logdet accumulator live in VMEM scratch."""
    s = pl.program_id(1)

    @pl.when(s == 0)
    def _init():
        x1_sc[...] = x1_ref[...]
        x2_sc[...] = x2_ref[...]
        acc_sc[...] = jnp.zeros_like(acc_sc)

    asc = ascale_ref[...]          # (2, Dh) f32, precomputed exp(logs) halves
    abi = abias_ref[...]           # (2, Dh) f32

    # ---- ActNorm (f32 elementwise): y = (x + b) * exp(logs) ----
    h1 = (x1_sc[...] + abi[0:1, :]) * asc[0:1, :]
    h2 = (x2_sc[...] + abi[1:2, :]) * asc[1:2, :]

    # ---- invertible 1x1 as 2x2 block matmul (bf16 operands, f32 accumulation) ----
    a1 = h1.astype(jnp.bfloat16)
    a2 = h2.astype(jnp.bfloat16)
    y1 = (jnp.dot(a1, W_ref[0], preferred_element_type=jnp.float32)
          + jnp.dot(a2, W_ref[2], preferred_element_type=jnp.float32))
    y2 = (jnp.dot(a1, W_ref[1], preferred_element_type=jnp.float32)
          + jnp.dot(a2, W_ref[3], preferred_element_type=jnp.float32))

    # ---- affine coupling: ReLU MLP conditioner on y1 (hidden padded to 128 lanes) ----
    hmid = jnp.maximum(
        jnp.dot(y1.astype(jnp.bfloat16), W1_ref[...],
                preferred_element_type=jnp.float32) + b1_ref[...], 0.0)
    hb = hmid.astype(jnp.bfloat16)
    b2 = b2_ref[...]               # (2, Dh): [scale-logit bias, translation bias]
    z_s = jnp.dot(hb, W2_ref[0], preferred_element_type=jnp.float32) + b2[0:1, :] + 2.0
    z_t = jnp.dot(hb, W2_ref[1], preferred_element_type=jnp.float32) + b2[1:2, :]

    ls = _log_sigmoid(z_s)         # log(scale), numerically stable
    scale = jnp.exp(ls)            # sigmoid(z_s)

    x1_sc[...] = y1
    x2_sc[...] = (y2 + z_t) * scale
    acc_sc[...] = acc_sc[...] + jnp.sum(ls, axis=1, keepdims=True)

    @pl.when(s == pl.num_programs(1) - 1)
    def _finalize():
        prior = -0.5 * (jnp.sum(x1_sc[...] * x1_sc[...], axis=1, keepdims=True)
                        + jnp.sum(x2_sc[...] * x2_sc[...], axis=1, keepdims=True))
        out_ref[...] = acc_sc[...] + prior


def glow1d_forward(x, params, *, tb=128):
    """Flatten, prep/split params in plain JAX, launch the Pallas kernel. Returns (B,) logp/dim."""
    B = x.shape[0]
    xf = x.reshape(B, -1).astype(jnp.float32)
    D = xf.shape[1]
    assert D % 2 == 0, "input_depth must be even for the coupling split"
    Dh = D // 2
    S = params["logs"].shape[0]
    H = params["W1"].shape[2]
    Hp = ((H + 127) // 128) * 128          # pad hidden width to a full 128-lane tile

    TB = tb
    B_pad = ((B + TB - 1) // TB) * TB      # pad batch up to the tile size
    num_tiles = B_pad // TB
    if B_pad != B:
        xf = jnp.pad(xf, ((0, B_pad - B), (0, 0)))

    # Pre-split activations into lane-aligned halves (no in-kernel lane slicing).
    x1 = xf[:, :Dh]
    x2 = xf[:, Dh:]

    logs, bias = params["logs"], params["bias"]
    ascale = jnp.exp(logs).reshape(S, 2, Dh).astype(jnp.float32)   # exp(logs) precomputed
    abias = bias.reshape(S, 2, Dh).astype(jnp.float32)

    # 1x1 weight as 2x2 blocks [W11, W12, W21, W22]; bf16 matmul operands.
    W = params["W"]
    Wb = jnp.stack([W[:, :Dh, :Dh], W[:, :Dh, Dh:],
                    W[:, Dh:, :Dh], W[:, Dh:, Dh:]], axis=1).astype(jnp.bfloat16)

    # Coupling MLP: zero-pad hidden width, split W2/b2 into scale/translate halves.
    W1p = jnp.pad(params["W1"], ((0, 0), (0, 0), (0, Hp - H))).astype(jnp.bfloat16)
    b1p = jnp.pad(params["b1"], ((0, 0), (0, Hp - H))).reshape(S, 1, Hp).astype(jnp.float32)
    W2p = jnp.pad(params["W2"], ((0, 0), (0, Hp - H), (0, 0)))
    W2b = jnp.stack([W2p[:, :, :Dh], W2p[:, :, Dh:]], axis=1).astype(jnp.bfloat16)
    b2b = params["b2"].reshape(S, 2, Dh).astype(jnp.float32)

    # Data-independent logdet / prior constants: added once in the wrapper.
    const = jnp.sum(logs) + jnp.sum(params["logdetW"]) - 0.5 * D * LOG2PI

    bmap = lambda b, s: (b, 0)
    smap3 = lambda b, s: (s, 0, 0)
    smap4 = lambda b, s: (s, 0, 0, 0)

    flops = 2 * B_pad * S * (D * D + Dh * Hp + Hp * D)
    transcendentals = 2 * B_pad * S * Dh
    bytes_accessed = int(2 * B_pad * Dh * 4 + Wb.size * 2 + W1p.size * 2 + W2b.size * 2
                         + (ascale.size + abias.size + b1p.size + b2b.size) * 4
                         + B_pad * 4)

    out = pl.pallas_call(
        glow1d_step_kernel,
        out_shape=jax.ShapeDtypeStruct((B_pad, 1), jnp.float32),
        grid_spec=pltpu.PrefetchScalarGridSpec(
            num_scalar_prefetch=0,
            grid=(num_tiles, S),
            in_specs=[
                pl.BlockSpec((TB, Dh), bmap),                  # x1 (resident across steps)
                pl.BlockSpec((TB, Dh), bmap),                  # x2
                pl.BlockSpec((None, 2, Dh), smap3),            # actnorm exp(logs) halves
                pl.BlockSpec((None, 2, Dh), smap3),            # actnorm bias halves
                pl.BlockSpec((None, 4, Dh, Dh), smap4),        # 1x1 weight blocks (bf16)
                pl.BlockSpec((None, Dh, Hp), smap3),           # coupling W1 (bf16)
                pl.BlockSpec((None, 1, Hp), smap3),            # coupling b1
                pl.BlockSpec((None, 2, Hp, Dh), smap4),        # coupling W2 blocks (bf16)
                pl.BlockSpec((None, 2, Dh), smap3),            # coupling b2 halves
            ],
            out_specs=pl.BlockSpec((TB, 1), bmap),
            scratch_shapes=[
                pltpu.VMEM((TB, Dh), jnp.float32),             # carried x1
                pltpu.VMEM((TB, Dh), jnp.float32),             # carried x2
                pltpu.VMEM((TB, 1), jnp.float32),              # carried logdet accumulator
            ],
        ),
        compiler_params=pltpu.CompilerParams(
            dimension_semantics=("parallel", "arbitrary"),
            vmem_limit_bytes=48 * 1024 * 1024),                # fits v7x's 64 MiB with headroom
        cost_estimate=pl.CostEstimate(flops=flops,
                                      transcendentals=transcendentals,
                                      bytes_accessed=bytes_accessed),
    )(x1, x2, ascale, abias, Wb, W1p, b1p, W2b, b2b)

    return (out[:B, 0] + const) * (1.0 / float(D))


def init_params(key, D, H, S):
    """Deterministic synthetic parameters for S GlowRevNet1d steps."""
    Dh = D // 2
    keys = jax.random.split(key, 6)
    logs = 0.05 * jax.random.normal(keys[0], (S, D), jnp.float32)
    bias = 0.05 * jax.random.normal(keys[1], (S, D), jnp.float32)
    # invertible 1x1 weights: random rotations (orthogonal via QR)
    Wraw = jax.random.normal(keys[2], (S, D, D), jnp.float32)
    W = jnp.stack([jnp.linalg.qr(Wraw[s])[0] for s in range(S)], axis=0)
    # log|det W|: slogdet has no Pallas equivalent -> plain-JAX wrapper glue.
    logdetW = jnp.stack(
        [jnp.linalg.slogdet(W[s])[1] for s in range(S)], axis=0).reshape(S, 1)
    W1 = 0.05 * jax.random.normal(keys[3], (S, Dh, H), jnp.float32)
    b1 = jnp.zeros((S, H), jnp.float32)
    W2 = 0.05 * jax.random.normal(keys[4], (S, H, D), jnp.float32)
    b2 = jnp.zeros((S, D), jnp.float32)
    return dict(logs=logs, bias=bias, W=W, logdetW=logdetW,
                W1=W1, b1=b1, W2=W2, b2=b2)


def glow1d_reference(x, params):
    """Pure-JAX reference with the same mixed precision (bf16 matmul / f32 elsewhere)."""
    B = x.shape[0]
    Fx = x.reshape(B, -1).astype(jnp.float32)
    D = Fx.shape[1]
    Dh = D // 2
    S = params["logs"].shape[0]
    bf = jnp.bfloat16
    logpk = jnp.zeros((B,), jnp.float32)
    for s in range(S):
        Fx = (Fx + params["bias"][s]) * jnp.exp(params["logs"][s])
        logpk = logpk + jnp.sum(params["logs"][s])
        Fx = jnp.dot(Fx.astype(bf), params["W"][s].astype(bf),
                     preferred_element_type=jnp.float32)
        logpk = logpk + params["logdetW"][s, 0]
        x1, x2 = Fx[:, :Dh], Fx[:, Dh:]
        h = jax.nn.relu(jnp.dot(x1.astype(bf), params["W1"][s].astype(bf),
                                preferred_element_type=jnp.float32) + params["b1"][s])
        nn_out = jnp.dot(h.astype(bf), params["W2"][s].astype(bf),
                         preferred_element_type=jnp.float32) + params["b2"][s]
        ls = _log_sigmoid(nn_out[:, :Dh] + 2.0)
        y2 = (x2 + nn_out[:, Dh:]) * jnp.exp(ls)
        logpk = logpk + jnp.sum(ls, axis=1)
        Fx = jnp.concatenate([x1, y2], axis=1)
    prior = -0.5 * jnp.sum(LOG2PI + Fx * Fx, axis=1)
    return (logpk + prior) / float(D)


if __name__ == "__main__":
    # Small shapes consistent with the module: x flattens to input_depth features.
    B, C, L = 2, 8, 16          # (batch, channels, length) -> input_depth = 128
    D = C * L                   # input_depth
    H = 32                      # interm_channels
    S = 2                       # steps

    key = jax.random.PRNGKey(0)
    kx, kp = jax.random.split(key)
    x = jax.random.normal(kx, (B, C, L), jnp.float32)
    params = init_params(kp, D, H, S)

    out = jax.block_until_ready(glow1d_forward(x, params))
    ref = jax.block_until_ready(glow1d_reference(x, params))
    np.testing.assert_allclose(np.asarray(out), np.asarray(ref), rtol=5e-3, atol=5e-3)

    print("KERNEL_OK")
</pallas_src>

<mosaic_0001>
module attributes {stable_mosaic.version = 11 : i64} {
  func.func @glow1d_step_kernel(%arg0: i32, %arg1: i32, %arg2: memref<128x64xf32, #tpu.memory_space<vmem>>, %arg3: memref<128x64xf32, #tpu.memory_space<vmem>>, %arg4: memref<1x2x64xf32, #tpu.memory_space<vmem>>, %arg5: memref<1x2x64xf32, #tpu.memory_space<vmem>>, %arg6: memref<1x4x64x64xbf16, #tpu.memory_space<vmem>>, %arg7: memref<1x64x128xbf16, #tpu.memory_space<vmem>>, %arg8: memref<1x1x128xf32, #tpu.memory_space<vmem>>, %arg9: memref<1x2x128x64xbf16, #tpu.memory_space<vmem>>, %arg10: memref<1x2x64xf32, #tpu.memory_space<vmem>>, %arg11: memref<128x1xf32, #tpu.memory_space<vmem>>, %arg12: memref<128x64xf32, #tpu.memory_space<vmem>>, %arg13: memref<128x64xf32, #tpu.memory_space<vmem>>, %arg14: memref<128x1xf32, #tpu.memory_space<vmem>>) attributes {dimension_semantics = [#tpu.dimension_semantics<parallel>, #tpu.dimension_semantics<arbitrary>], iteration_bounds = array<i64: 1, 2>, scalar_prefetch = 0 : i64, scratch_operands = 3 : i64, tpu.core_type = #tpu.core_type<tc>, window_params = [{transform_indices = @transform_0, window_bounds = array<i64: 128, 64>}, {transform_indices = @transform_1, window_bounds = array<i64: 128, 64>}, {transform_indices = @transform_2, window_bounds = array<i64: 1, 2, 64>}, {transform_indices = @transform_3, window_bounds = array<i64: 1, 2, 64>}, {transform_indices = @transform_4, window_bounds = array<i64: 1, 4, 64, 64>}, {transform_indices = @transform_5, window_bounds = array<i64: 1, 64, 128>}, {transform_indices = @transform_6, window_bounds = array<i64: 1, 1, 128>}, {transform_indices = @transform_7, window_bounds = array<i64: 1, 2, 128, 64>}, {transform_indices = @transform_8, window_bounds = array<i64: 1, 2, 64>}, {transform_indices = @transform_9, window_bounds = array<i64: 128, 1>}]} {
    %c0_i32 = arith.constant 0 : i32
    %0 = arith.cmpi eq, %arg1, %c0_i32 : i32
    %1 = arith.extui %0 : i1 to i32
    %c0_i32_0 = arith.constant 0 : i32
    %2 = arith.cmpi ne, %1, %c0_i32_0 : i32
    scf.if %2 {
      %c0_63 = arith.constant 0 : index
      %c0_64 = arith.constant 0 : index
      %91 = vector.load %arg2[%c0_63, %c0_64] : memref<128x64xf32, #tpu.memory_space<vmem>>, vector<128x64xf32>
      %c0_65 = arith.constant 0 : index
      %c0_66 = arith.constant 0 : index
      %92 = vector.load %arg12[%c0_65, %c0_66] : memref<128x64xf32, #tpu.memory_space<vmem>>, vector<128x64xf32>
      tpu.vector_store %arg12[%c0_65, %c0_66], %91 {strides = array<i32>} : memref<128x64xf32, #tpu.memory_space<vmem>>, vector<128x64xf32>,
      %c0_67 = arith.constant 0 : index
      %c0_68 = arith.constant 0 : index
      %93 = vector.load %arg3[%c0_67, %c0_68] : memref<128x64xf32, #tpu.memory_space<vmem>>, vector<128x64xf32>
      %c0_69 = arith.constant 0 : index
      %c0_70 = arith.constant 0 : index
      %94 = vector.load %arg13[%c0_69, %c0_70] : memref<128x64xf32, #tpu.memory_space<vmem>>, vector<128x64xf32>
      tpu.vector_store %arg13[%c0_69, %c0_70], %93 {strides = array<i32>} : memref<128x64xf32, #tpu.memory_space<vmem>>, vector<128x64xf32>,
      %cst_71 = arith.constant 0.000000e+00 : f32
      %95 = vector.broadcast %cst_71 : f32 to vector<128x1xf32>
      %c0_72 = arith.constant 0 : index
      %c0_73 = arith.constant 0 : index
      %96 = vector.load %arg14[%c0_72, %c0_73] : memref<128x1xf32, #tpu.memory_space<vmem>>, vector<128x1xf32>
      tpu.vector_store %arg14[%c0_72, %c0_73], %95 {strides = array<i32>} : memref<128x1xf32, #tpu.memory_space<vmem>>, vector<128x1xf32>,
    } else {
    }
    %c0 = arith.constant 0 : index
    %c0_1 = arith.constant 0 : index
    %c0_2 = arith.constant 0 : index
    %3 = vector.load %arg4[%c0, %c0_1, %c0_2] : memref<1x2x64xf32, #tpu.memory_space<vmem>>, vector<1x2x64xf32>
    %4 = vector.shape_cast %3 : vector<1x2x64xf32> to vector<2x64xf32>
    %c0_3 = arith.constant 0 : index
    %c0_4 = arith.constant 0 : index
    %c0_5 = arith.constant 0 : index
    %5 = vector.load %arg5[%c0_3, %c0_4, %c0_5] : memref<1x2x64xf32, #tpu.memory_space<vmem>>, vector<1x2x64xf32>
    %6 = vector.shape_cast %5 : vector<1x2x64xf32> to vector<2x64xf32>
    %c0_6 = arith.constant 0 : index
    %c0_7 = arith.constant 0 : index
    %7 = vector.load %arg12[%c0_6, %c0_7] : memref<128x64xf32, #tpu.memory_space<vmem>>, vector<128x64xf32>
    %8 = vector.extract_strided_slice %6 {offsets = [0, 0], sizes = [1, 64], strides = [1, 1]} : vector<2x64xf32> to vector<1x64xf32>
    %9 = vector.broadcast %8 : vector<1x64xf32> to vector<128x64xf32>
    %10 = arith.addf %7, %9 : vector<128x64xf32>
    %11 = vector.extract_strided_slice %4 {offsets = [0, 0], sizes = [1, 64], strides = [1, 1]} : vector<2x64xf32> to vector<1x64xf32>
    %12 = vector.broadcast %11 : vector<1x64xf32> to vector<128x64xf32>
    %13 = arith.mulf %10, %12 : vector<128x64xf32>
    %c0_8 = arith.constant 0 : index
    %c0_9 = arith.constant 0 : index
    %14 = vector.load %arg13[%c0_8, %c0_9] : memref<128x64xf32, #tpu.memory_space<vmem>>, vector<128x64xf32>
    %15 = vector.extract_strided_slice %6 {offsets = [1, 0], sizes = [1, 64], strides = [1, 1]} : vector<2x64xf32> to vector<1x64xf32>
    %16 = vector.broadcast %15 : vector<1x64xf32> to vector<128x64xf32>
    %17 = arith.addf %14, %16 : vector<128x64xf32>
    %18 = vector.extract_strided_slice %4 {offsets = [1, 0], sizes = [1, 64], strides = [1, 1]} : vector<2x64xf32> to vector<1x64xf32>
    %19 = vector.broadcast %18 : vector<1x64xf32> to vector<128x64xf32>
    %20 = arith.mulf %17, %19 : vector<128x64xf32>
    %21 = arith.truncf %13 : vector<128x64xf32> to vector<128x64xbf16>
    %22 = arith.truncf %20 : vector<128x64xf32> to vector<128x64xbf16>
    %c0_10 = arith.constant 0 : index
    %c0_11 = arith.constant 0 : index
    %c0_12 = arith.constant 0 : index
    %c0_13 = arith.constant 0 : index
    %23 = vector.load %arg6[%c0_10, %c0_11, %c0_12, %c0_13] : memref<1x4x64x64xbf16, #tpu.memory_space<vmem>>, vector<1x1x64x64xbf16>
    %24 = vector.shape_cast %23 : vector<1x1x64x64xbf16> to vector<64x64xbf16>
    %cst = arith.constant dense<0.000000e+00> : vector<128x64xf32>
    %25 = tpu.matmul %21, %24, %cst {dimension_numbers = #tpu.dot_dimension_numbers<[1], [0], [0], [1], [0, 0, 1, 1], [], []>} : vector<128x64xbf16>, vector<64x64xbf16>, vector<128x64xf32> -> vector<128x64xf32>
    %c0_14 = arith.constant 0 : index
    %c2 = arith.constant 2 : index
    %c0_15 = arith.constant 0 : index
    %c0_16 = arith.constant 0 : index
    %26 = vector.load %arg6[%c0_14, %c2, %c0_15, %c0_16] : memref<1x4x64x64xbf16, #tpu.memory_space<vmem>>, vector<1x1x64x64xbf16>
    %27 = vector.shape_cast %26 : vector<1x1x64x64xbf16> to vector<64x64xbf16>
    %cst_17 = arith.constant dense<0.000000e+00> : vector<128x64xf32>
    %28 = tpu.matmul %22, %27, %cst_17 {dimension_numbers = #tpu.dot_dimension_numbers<[1], [0], [0], [1], [0, 0, 1, 1], [], []>} : vector<128x64xbf16>, vector<64x64xbf16>, vector<128x64xf32> -> vector<128x64xf32>
    %29 = arith.addf %25, %28 : vector<128x64xf32>
    %c0_18 = arith.constant 0 : index
    %c1 = arith.constant 1 : index
    %c0_19 = arith.constant 0 : index
    %c0_20 = arith.constant 0 : index
    %30 = vector.load %arg6[%c0_18, %c1, %c0_19, %c0_20] : memref<1x4x64x64xbf16, #tpu.memory_space<vmem>>, vector<1x1x64x64xbf16>
    %31 = vector.shape_cast %30 : vector<1x1x64x64xbf16> to vector<64x64xbf16>
    %cst_21 = arith.constant dense<0.000000e+00> : vector<128x64xf32>
    %32 = tpu.matmul %21, %31, %cst_21 {dimension_numbers = #tpu.dot_dimension_numbers<[1], [0], [0], [1], [0, 0, 1, 1], [], []>} : vector<128x64xbf16>, vector<64x64xbf16>, vector<128x64xf32> -> vector<128x64xf32>
    %c0_22 = arith.constant 0 : index
    %c3 = arith.constant 3 : index
    %c0_23 = arith.constant 0 : index
    %c0_24 = arith.constant 0 : index
    %33 = vector.load %arg6[%c0_22, %c3, %c0_23, %c0_24] : memref<1x4x64x64xbf16, #tpu.memory_space<vmem>>, vector<1x1x64x64xbf16>
    %34 = vector.shape_cast %33 : vector<1x1x64x64xbf16> to vector<64x64xbf16>
    %cst_25 = arith.constant dense<0.000000e+00> : vector<128x64xf32>
    %35 = tpu.matmul %22, %34, %cst_25 {dimension_numbers = #tpu.dot_dimension_numbers<[1], [0], [0], [1], [0, 0, 1, 1], [], []>} : vector<128x64xbf16>, vector<64x64xbf16>, vector<128x64xf32> -> vector<128x64xf32>
    %36 = arith.addf %32, %35 : vector<128x64xf32>
    %37 = arith.truncf %29 : vector<128x64xf32> to vector<128x64xbf16>
    %c0_26 = arith.constant 0 : index
    %c0_27 = arith.constant 0 : index
    %c0_28 = arith.constant 0 : index
    %38 = vector.load %arg7[%c0_26, %c0_27, %c0_28] : memref<1x64x128xbf16, #tpu.memory_space<vmem>>, vector<1x64x128xbf16>
    %39 = vector.shape_cast %38 : vector<1x64x128xbf16> to vector<64x128xbf16>
    %cst_29 = arith.constant dense<0.000000e+00> : vector<128x128xf32>
    %40 = tpu.matmul %37, %39, %cst_29 {dimension_numbers = #tpu.dot_dimension_numbers<[1], [0], [0], [1], [0, 0, 1, 1], [], []>} : vector<128x64xbf16>, vector<64x128xbf16>, vector<128x128xf32> -> vector<128x128xf32>
    %c0_30 = arith.constant 0 : index
    %c0_31 = arith.constant 0 : index
    %c0_32 = arith.constant 0 : index
    %41 = vector.load %arg8[%c0_30, %c0_31, %c0_32] : memref<1x1x128xf32, #tpu.memory_space<vmem>>, vector<1x1x128xf32>
    %42 = vector.shape_cast %41 : vector<1x1x128xf32> to vector<1x128xf32>
    %43 = vector.broadcast %42 : vector<1x128xf32> to vector<128x128xf32>
    %44 = arith.addf %40, %43 : vector<128x128xf32>
    %cst_33 = arith.constant 0.000000e+00 : f32
    %45 = vector.broadcast %cst_33 : f32 to vector<128x128xf32>
    %46 = arith.maximumf %44, %45 : vector<128x128xf32>
    %47 = arith.truncf %46 : vector<128x128xf32> to vector<128x128xbf16>
    %c0_34 = arith.constant 0 : index
    %c0_35 = arith.constant 0 : index
    %c0_36 = arith.constant 0 : index
    %48 = vector.load %arg10[%c0_34, %c0_35, %c0_36] : memref<1x2x64xf32, #tpu.memory_space<vmem>>, vector<1x2x64xf32>
    %49 = vector.shape_cast %48 : vector<1x2x64xf32> to vector<2x64xf32>
    %c0_37 = arith.constant 0 : index
    %c0_38 = arith.constant 0 : index
    %c0_39 = arith.constant 0 : index
    %c0_40 = arith.constant 0 : index
    %50 = vector.load %arg9[%c0_37, %c0_38, %c0_39, %c0_40] : memref<1x2x128x64xbf16, #tpu.memory_space<vmem>>, vector<1x1x128x64xbf16>
    %51 = vector.shape_cast %50 : vector<1x1x128x64xbf16> to vector<128x64xbf16>
    %cst_41 = arith.constant dense<0.000000e+00> : vector<128x64xf32>
    %52 = tpu.matmul %47, %51, %cst_41 {dimension_numbers = #tpu.dot_dimension_numbers<[1], [0], [0], [1], [0, 0, 1, 1], [], []>} : vector<128x128xbf16>, vector<128x64xbf16>, vector<128x64xf32> -> vector<128x64xf32>
    %53 = vector.extract_strided_slice %49 {offsets = [0, 0], sizes = [1, 64], strides = [1, 1]} : vector<2x64xf32> to vector<1x64xf32>
    %54 = vector.broadcast %53 : vector<1x64xf32> to vector<128x64xf32>
    %55 = arith.addf %52, %54 : vector<128x64xf32>
    %cst_42 = arith.constant 2.000000e+00 : f32
    %56 = vector.broadcast %cst_42 : f32 to vector<128x64xf32>
    %57 = arith.addf %55, %56 : vector<128x64xf32>
    %c0_43 = arith.constant 0 : index
    %c1_44 = arith.constant 1 : index
    %c0_45 = arith.constant 0 : index
    %c0_46 = arith.constant 0 : index
    %58 = vector.load %arg9[%c0_43, %c1_44, %c0_45, %c0_46] : memref<1x2x128x64xbf16, #tpu.memory_space<vmem>>, vector<1x1x128x64xbf16>
    %59 = vector.shape_cast %58 : vector<1x1x128x64xbf16> to vector<128x64xbf16>
    %cst_47 = arith.constant dense<0.000000e+00> : vector<128x64xf32>
    %60 = tpu.matmul %47, %59, %cst_47 {dimension_numbers = #tpu.dot_dimension_numbers<[1], [0], [0], [1], [0, 0, 1, 1], [], []>} : vector<128x128xbf16>, vector<128x64xbf16>, vector<128x64xf32> -> vector<128x64xf32>
    %61 = vector.extract_strided_slice %49 {offsets = [1, 0], sizes = [1, 64], strides = [1, 1]} : vector<2x64xf32> to vector<1x64xf32>
    %62 = vector.broadcast %61 : vector<1x64xf32> to vector<128x64xf32>
    %63 = arith.addf %60, %62 : vector<128x64xf32>
    %cst_48 = arith.constant 0.000000e+00 : f32
    %64 = vector.broadcast %cst_48 : f32 to vector<128x64xf32>
    %65 = arith.subf %64, %57 : vector<128x64xf32>
    %cst_49 = arith.constant 0.000000e+00 : f32
    %66 = vector.broadcast %cst_49 : f32 to vector<128x64xf32>
    %67 = arith.maximumf %65, %66 : vector<128x64xf32>
    %68 = math.absf %57 : vector<128x64xf32>
    %cst_50 = arith.constant 0.000000e+00 : f32
    %69 = vector.broadcast %cst_50 : f32 to vector<128x64xf32>
    %70 = arith.subf %69, %68 : vector<128x64xf32>
    %71 = math.exp %70 : vector<128x64xf32>
    %cst_51 = arith.constant 1.000000e+00 : f32
    %72 = vector.broadcast %cst_51 : f32 to vector<128x64xf32>
    %73 = arith.addf %72, %71 : vector<128x64xf32>
    %74 = math.log %73 : vector<128x64xf32>
    %75 = arith.addf %67, %74 : vector<128x64xf32>
    %cst_52 = arith.constant 0.000000e+00 : f32
    %76 = vector.broadcast %cst_52 : f32 to vector<128x64xf32>
    %77 = arith.subf %76, %75 : vector<128x64xf32>
    %78 = math.exp %77 : vector<128x64xf32>
    %c0_53 = arith.constant 0 : index
    %c0_54 = arith.constant 0 : index
    %79 = vector.load %arg12[%c0_53, %c0_54] : memref<128x64xf32, #tpu.memory_space<vmem>>, vector<128x64xf32>
    tpu.vector_store %arg12[%c0_53, %c0_54], %29 {strides = array<i32>} : memref<128x64xf32, #tpu.memory_space<vmem>>, vector<128x64xf32>,
    %80 = arith.addf %36, %63 : vector<128x64xf32>
    %81 = arith.mulf %80, %78 : vector<128x64xf32>
    %c0_55 = arith.constant 0 : index
    %c0_56 = arith.constant 0 : index
    %82 = vector.load %arg13[%c0_55, %c0_56] : memref<128x64xf32, #tpu.memory_space<vmem>>, vector<128x64xf32>
    tpu.vector_store %arg13[%c0_55, %c0_56], %81 {strides = array<i32>} : memref<128x64xf32, #tpu.memory_space<vmem>>, vector<128x64xf32>,
    %c0_57 = arith.constant 0 : index
    %c0_58 = arith.constant 0 : index
    %83 = vector.load %arg14[%c0_57, %c0_58] : memref<128x1xf32, #tpu.memory_space<vmem>>, vector<128x1xf32>
    %cst_59 = arith.constant dense<0.000000e+00> : vector<128xf32>
    %84 = vector.multi_reduction <add>, %77, %cst_59 [1] : vector<128x64xf32> to vector<128xf32>
    %85 = vector.shape_cast %84 : vector<128xf32> to vector<128x1xf32>
    %86 = arith.addf %83, %85 : vector<128x1xf32>
    %c0_60 = arith.constant 0 : index
    %c0_61 = arith.constant 0 : index
    %87 = vector.load %arg14[%c0_60, %c0_61] : memref<128x1xf32, #tpu.memory_space<vmem>>, vector<128x1xf32>
    tpu.vector_store %arg14[%c0_60, %c0_61], %86 {strides = array<i32>} : memref<128x1xf32, #tpu.memory_space<vmem>>, vector<128x1xf32>,
    %c1_i32 = arith.constant 1 : i32
    %88 = arith.cmpi eq, %arg1, %c1_i32 : i32
    %89 = arith.extui %88 : i1 to i32
    %c0_i32_62 = arith.constant 0 : i32
    %90 = arith.cmpi ne, %89, %c0_i32_62 : i32
    scf.if %90 {
      %c0_63 = arith.constant 0 : index
      %c0_64 = arith.constant 0 : index
      %91 = vector.load %arg12[%c0_63, %c0_64] : memref<128x64xf32, #tpu.memory_space<vmem>>, vector<128x64xf32>
      %c0_65 = arith.constant 0 : index
      %c0_66 = arith.constant 0 : index
      %92 = vector.load %arg12[%c0_65, %c0_66] : memref<128x64xf32, #tpu.memory_space<vmem>>, vector<128x64xf32>
      %93 = arith.mulf %91, %92 : vector<128x64xf32>
      %cst_67 = arith.constant dense<0.000000e+00> : vector<128xf32>
      %94 = vector.multi_reduction <add>, %93, %cst_67 [1] : vector<128x64xf32> to vector<128xf32>
      %95 = vector.shape_cast %94 : vector<128xf32> to vector<128x1xf32>
      %c0_68 = arith.constant 0 : index
      %c0_69 = arith.constant 0 : index
      %96 = vector.load %arg13[%c0_68, %c0_69] : memref<128x64xf32, #tpu.memory_space<vmem>>, vector<128x64xf32>
      %c0_70 = arith.constant 0 : index
      %c0_71 = arith.constant 0 : index
      %97 = vector.load %arg13[%c0_70, %c0_71] : memref<128x64xf32, #tpu.memory_space<vmem>>, vector<128x64xf32>
      %98 = arith.mulf %96, %97 : vector<128x64xf32>
      %cst_72 = arith.constant dense<0.000000e+00> : vector<128xf32>
      %99 = vector.multi_reduction <add>, %98, %cst_72 [1] : vector<128x64xf32> to vector<128xf32>
      %100 = vector.shape_cast %99 : vector<128xf32> to vector<128x1xf32>
      %101 = arith.addf %95, %100 : vector<128x1xf32>
      %cst_73 = arith.constant -5.000000e-01 : f32
      %102 = vector.broadcast %cst_73 : f32 to vector<128x1xf32>
      %103 = arith.mulf %102, %101 : vector<128x1xf32>
      %c0_74 = arith.constant 0 : index
      %c0_75 = arith.constant 0 : index
      %104 = vector.load %arg14[%c0_74, %c0_75] : memref<128x1xf32, #tpu.memory_space<vmem>>, vector<128x1xf32>
      %105 = arith.addf %104, %103 : vector<128x1xf32>
      %c0_76 = arith.constant 0 : index
      %c0_77 = arith.constant 0 : index
      %106 = vector.load %arg11[%c0_76, %c0_77] : memref<128x1xf32, #tpu.memory_space<vmem>>, vector<128x1xf32>
      tpu.vector_store %arg11[%c0_76, %c0_77], %105 {strides = array<i32>} : memref<128x1xf32, #tpu.memory_space<vmem>>, vector<128x1xf32>,
    } else {
    }
    return
  }
  func.func @transform_0(%arg0: i32, %arg1: i32) -> (i32, i32) {
    %c0_i32 = arith.constant 0 : i32
    %c0_i32_0 = arith.constant 0 : i32
    return %arg0, %c0_i32 : i32, i32
  }
  func.func @transform_1(%arg0: i32, %arg1: i32) -> (i32, i32) {
    %c0_i32 = arith.constant 0 : i32
    %c0_i32_0 = arith.constant 0 : i32
    return %arg0, %c0_i32 : i32, i32
  }
  func.func @transform_2(%arg0: i32, %arg1: i32) -> (i32, i32, i32) {
    %c0_i32 = arith.constant 0 : i32
    %c0_i32_0 = arith.constant 0 : i32
    %c0_i32_1 = arith.constant 0 : i32
    return %arg1, %c0_i32, %c0_i32_0 : i32, i32, i32
  }
  func.func @transform_3(%arg0: i32, %arg1: i32) -> (i32, i32, i32) {
    %c0_i32 = arith.constant 0 : i32
    %c0_i32_0 = arith.constant 0 : i32
    %c0_i32_1 = arith.constant 0 : i32
    return %arg1, %c0_i32, %c0_i32_0 : i32, i32, i32
  }
  func.func @transform_4(%arg0: i32, %arg1: i32) -> (i32, i32, i32, i32) {
    %c0_i32 = arith.constant 0 : i32
    %c0_i32_0 = arith.constant 0 : i32
    %c0_i32_1 = arith.constant 0 : i32
    %c0_i32_2 = arith.constant 0 : i32
    return %arg1, %c0_i32, %c0_i32_0, %c0_i32_1 : i32, i32, i32, i32
  }
  func.func @transform_5(%arg0: i32, %arg1: i32) -> (i32, i32, i32) {
    %c0_i32 = arith.constant 0 : i32
    %c0_i32_0 = arith.constant 0 : i32
    %c0_i32_1 = arith.constant 0 : i32
    return %arg1, %c0_i32, %c0_i32_0 : i32, i32, i32
  }
  func.func @transform_6(%arg0: i32, %arg1: i32) -> (i32, i32, i32) {
    %c0_i32 = arith.constant 0 : i32
    %c0_i32_0 = arith.constant 0 : i32
    %c0_i32_1 = arith.constant 0 : i32
    return %arg1, %c0_i32, %c0_i32_0 : i32, i32, i32
  }
  func.func @transform_7(%arg0: i32, %arg1: i32) -> (i32, i32, i32, i32) {
    %c0_i32 = arith.constant 0 : i32
    %c0_i32_0 = arith.constant 0 : i32
    %c0_i32_1 = arith.constant 0 : i32
    %c0_i32_2 = arith.constant 0 : i32
    return %arg1, %c0_i32, %c0_i32_0, %c0_i32_1 : i32, i32, i32, i32
  }
  func.func @transform_8(%arg0: i32, %arg1: i32) -> (i32, i32, i32) {
    %c0_i32 = arith.constant 0 : i32
    %c0_i32_0 = arith.constant 0 : i32
    %c0_i32_1 = arith.constant 0 : i32
    return %arg1, %c0_i32, %c0_i32_0 : i32, i32, i32
  }
  func.func @transform_9(%arg0: i32, %arg1: i32) -> (i32, i32) {
    %c0_i32 = arith.constant 0 : i32
    %c0_i32_0 = arith.constant 0 : i32
    return %arg0, %c0_i32 : i32, i32
  }
}

</mosaic_0001>

<llo_original>
// kernel: tpu_custom_call.1
$region0: #{tpu_custom_call.1}
  #allocation0 [shape = 'u32[]', space=smem, size = 0x4, offset = 0x4, fixed_abs, tag = 'smem constant byte address 0x4 - core index']
  #allocation1 [shape = 'u32[144,128]{1,0:T(1,128)}', space=vmem, size = 0x12000, scoped, tag = 'internal scratch']
  #allocation2 [shape = 'f32[128,64]{1,0:T(8,128)}', space=vmem, size = 0x10000, scoped, tag = 'scratch operand']
  #allocation3 [shape = 'f32[128,64]{1,0:T(8,128)}', space=vmem, size = 0x10000, scoped, tag = 'scratch operand']
  #allocation4 [shape = 'f32[128,1]{1,0:T(8,128)}', space=vmem, size = 0x10000, scoped, tag = 'scratch operand']
  %s0 = inlined_call_operand.vmem [shape: f32[128,64], index: 0, kind: input, shape index: {}]
  %s1 = inlined_call_operand.vmem [shape: f32[128,64], index: 1, kind: input, shape index: {}]
  %s2 = inlined_call_operand.vmem [shape: f32[2,2,64], index: 2, kind: input, shape index: {}]
  %s3 = inlined_call_operand.vmem [shape: f32[2,2,64], index: 3, kind: input, shape index: {}]
  %s4 = inlined_call_operand.vmem [shape: bf16[2,4,64,64], index: 4, kind: input, shape index: {}]
  %s5 = inlined_call_operand.vmem [shape: bf16[2,64,128], index: 5, kind: input, shape index: {}]
  %s6 = inlined_call_operand.vmem [shape: f32[2,1,128], index: 6, kind: input, shape index: {}]
  %s7 = inlined_call_operand.vmem [shape: bf16[2,2,128,64], index: 7, kind: input, shape index: {}]
  %s8 = inlined_call_operand.vmem [shape: f32[2,2,64], index: 8, kind: input, shape index: {}]
  %s9 = inlined_call_operand.vmem [shape: f32[128,1], index: 9, kind: output, shape index: {}]
  %s10 = sld [smem:[#allocation0]]
  $region77: #{tpu_custom_call.1} parent=0
    _
  %s12 = ssub.s32 1, %s10
  %s13 = scalar_select 0, %s12, %s10
  loop: start=0, step=1, limit=4
  $region2: #{tpu_custom_call.1} parent=0 // loop_pre_header
    _
  $region3: #{tpu_custom_call.1} parent=0 // loop_header
    %s15 = sphi 0, %s19
    %p16 = scmp.ge.s32.totalorder %s15, 4
    %s22 = sphi 0, %s34
    %s23 = sphi 0, %s30
    %s24 = sphi 0, %s22
    %s25 = sphi 0, %s23
    %s26 = sphi 0, %s24
    %s27 = sphi 0, %s25
    %s37 = sphi 0, %s39
    %s40 = sphi 0, %s37
    %s41 = sphi 0, %s40
    %s57 = sphi 0, %s41
    %s63 = sphi 0, %s65
    %s66 = sphi 0, %s63
    %s67 = sphi 0, %s66
    %s83 = sphi 0, %s67
    %s89 = sphi 0, %s91
    %s92 = sphi 0, %s89
    %s93 = sphi 0, %s92
    %s109 = sphi 0, %s93
    %s115 = sphi 0, %s117
    %s118 = sphi 0, %s115
    %s119 = sphi 0, %s118
    %s135 = sphi 0, %s119
    %s141 = sphi 0, %s143
    %s144 = sphi 0, %s141
    %s145 = sphi 0, %s144
    %s161 = sphi 0, %s145
    %s167 = sphi 0, %s169
    %s170 = sphi 0, %s167
    %s171 = sphi 0, %s170
    %s187 = sphi 0, %s171
    %s193 = sphi 0, %s195
    %s196 = sphi 0, %s193
    %s197 = sphi 0, %s196
    %s213 = sphi 0, %s197
    %s219 = sphi 0, %s221
    %s222 = sphi 0, %s219
    %s223 = sphi 0, %s222
    %s239 = sphi 0, %s223
    %s245 = sphi 0, %s247
    %s248 = sphi 0, %s245
    %s249 = sphi 0, %s248
    %s265 = sphi 0, %s249
    %s271 = sphi 0, %s273
    %s274 = sphi 0, %s271
    %s275 = sphi 0, %s274
    %s291 = sphi 0, %s275
  $region4: #{tpu_custom_call.1} parent=0 // loop_header_branch
    %18 = sbr.rel (%p16) target = $region8
  $region5: #{tpu_custom_call.1} parent=0 // loop_body
    %s20 = ssub.s32 %s15, 1
    %s21 = ssub.s32 %s15, 2
    %s28 = sadd.s32 1, %s23
    %p29 = scmp.ge.s32.totalorder %s28, 2
    %s30 = scalar_select %p29, 0, %s28
    %s31 = sadd.s32 1, %s22
    %s32 = scalar_select %p29, %s31, %s22
    %p33 = scmp.ge.s32.totalorder %s32, 1
    %s34 = scalar_select %p33, 0, %s32
    %s35 = ssub.s32 %s22, %s34
    %p36 = scmp.eq.s32.totalorder %s35, 0
    %s38 = sadd.s32 %s37, 1
    %s39 = scalar_select %p36, %s37, %s38
    %p42 = pneg %p36
    %p43 = scmp.eq.s32.totalorder %s15, 1
    %p44 = por %p42, %p43
    %p45 = scmp.ne.s32.totalorder %s37, %s40
    %p46 = scmp.eq.s32.totalorder %s15, 0
    %p47 = por %p45, %p46
    %p48 = scmp.ne.s32.totalorder %s37, %s40
    %p49 = scmp.eq.s32.totalorder %s20, 1
    %p50 = por %p48, %p49
    %p51 = scmp.ne.s32.totalorder %s40, %s41
    %p52 = scmp.eq.s32.totalorder %s20, 0
    %p53 = por %p51, %p52
    %p54 = scmp.ne.s32.totalorder %s40, %s41
    %p55 = scmp.eq.s32.totalorder %s21, 1
    %p56 = por %p54, %p55
    %p58 = scmp.ne.s32.totalorder %s41, %s57
    %p59 = scmp.eq.s32.totalorder %s21, 0
    %p60 = por %p58, %p59
    %s61 = ssub.s32 %s22, %s34
    %p62 = scmp.eq.s32.totalorder %s61, 0
    %s64 = sadd.s32 %s63, 1
    %s65 = scalar_select %p62, %s63, %s64
    %p68 = pneg %p62
    %p69 = scmp.eq.s32.totalorder %s15, 1
    %p70 = por %p68, %p69
    %p71 = scmp.ne.s32.totalorder %s63, %s66
    %p72 = scmp.eq.s32.totalorder %s15, 0
    %p73 = por %p71, %p72
    %p74 = scmp.ne.s32.totalorder %s63, %s66
    %p75 = scmp.eq.s32.totalorder %s20, 1
    %p76 = por %p74, %p75
    %p77 = scmp.ne.s32.totalorder %s66, %s67
    %p78 = scmp.eq.s32.totalorder %s20, 0
    %p79 = por %p77, %p78
    %p80 = scmp.ne.s32.totalorder %s66, %s67
    %p81 = scmp.eq.s32.totalorder %s21, 1
    %p82 = por %p80, %p81
    %p84 = scmp.ne.s32.totalorder %s67, %s83
    %p85 = scmp.eq.s32.totalorder %s21, 0
    %p86 = por %p84, %p85
    %s87 = ssub.s32 %s23, %s30
    %p88 = scmp.eq.s32.totalorder %s87, 0
    %s90 = sadd.s32 %s89, 1
    %s91 = scalar_select %p88, %s89, %s90
    %p94 = pneg %p88
    %p95 = scmp.eq.s32.totalorder %s15, 1
    %p96 = por %p94, %p95
    %p97 = scmp.ne.s32.totalorder %s89, %s92
    %p98 = scmp.eq.s32.totalorder %s15, 0
    %p99 = por %p97, %p98
    %p100 = scmp.ne.s32.totalorder %s89, %s92
    %p101 = scmp.eq.s32.totalorder %s20, 1
    %p102 = por %p100, %p101
    %p103 = scmp.ne.s32.totalorder %s92, %s93
    %p104 = scmp.eq.s32.totalorder %s20, 0
    %p105 = por %p103, %p104
    %p106 = scmp.ne.s32.totalorder %s92, %s93
    %p107 = scmp.eq.s32.totalorder %s21, 1
    %p108 = por %p106, %p107
    %p110 = scmp.ne.s32.totalorder %s93, %s109
    %p111 = scmp.eq.s32.totalorder %s21, 0
    %p112 = por %p110, %p111
    %s113 = ssub.s32 %s23, %s30
    %p114 = scmp.eq.s32.totalorder %s113, 0
    %s116 = sadd.s32 %s115, 1
    %s117 = scalar_select %p114, %s115, %s116
    %p120 = pneg %p114
    %p121 = scmp.eq.s32.totalorder %s15, 1
    %p122 = por %p120, %p121
    %p123 = scmp.ne.s32.totalorder %s115, %s118
    %p124 = scmp.eq.s32.totalorder %s15, 0
    %p125 = por %p123, %p124
    %p126 = scmp.ne.s32.totalorder %s115, %s118
    %p127 = scmp.eq.s32.totalorder %s20, 1
    %p128 = por %p126, %p127
    %p129 = scmp.ne.s32.totalorder %s118, %s119
    %p130 = scmp.eq.s32.totalorder %s20, 0
    %p131 = por %p129, %p130
    %p132 = scmp.ne.s32.totalorder %s118, %s119
    %p133 = scmp.eq.s32.totalorder %s21, 1
    %p134 = por %p132, %p133
    %p136 = scmp.ne.s32.totalorder %s119, %s135
    %p137 = scmp.eq.s32.totalorder %s21, 0
    %p138 = por %p136, %p137
    %s139 = ssub.s32 %s23, %s30
    %p140 = scmp.eq.s32.totalorder %s139, 0
    %s142 = sadd.s32 %s141, 1
    %s143 = scalar_select %p140, %s141, %s142
    %p146 = pneg %p140
    %p147 = scmp.eq.s32.totalorder %s15, 1
    %p148 = por %p146, %p147
    %p149 = scmp.ne.s32.totalorder %s141, %s144
    %p150 = scmp.eq.s32.totalorder %s15, 0
    %p151 = por %p149, %p150
    %p152 = scmp.ne.s32.totalorder %s141, %s144
    %p153 = scmp.eq.s32.totalorder %s20, 1
    %p154 = por %p152, %p153
    %p155 = scmp.ne.s32.totalorder %s144, %s145
    %p156 = scmp.eq.s32.totalorder %s20, 0
    %p157 = por %p155, %p156
    %p158 = scmp.ne.s32.totalorder %s144, %s145
    %p159 = scmp.eq.s32.totalorder %s21, 1
    %p160 = por %p158, %p159
    %p162 = scmp.ne.s32.totalorder %s145, %s161
    %p163 = scmp.eq.s32.totalorder %s21, 0
    %p164 = por %p162, %p163
    %s165 = ssub.s32 %s23, %s30
    %p166 = scmp.eq.s32.totalorder %s165, 0
    %s168 = sadd.s32 %s167, 1
    %s169 = scalar_select %p166, %s167, %s168
    %p172 = pneg %p166
    %p173 = scmp.eq.s32.totalorder %s15, 1
    %p174 = por %p172, %p173
    %p175 = scmp.ne.s32.totalorder %s167, %s170
    %p176 = scmp.eq.s32.totalorder %s15, 0
    %p177 = por %p175, %p176
    %p178 = scmp.ne.s32.totalorder %s167, %s170
    %p179 = scmp.eq.s32.totalorder %s20, 1
    %p180 = por %p178, %p179
    %p181 = scmp.ne.s32.totalorder %s170, %s171
    %p182 = scmp.eq.s32.totalorder %s20, 0
    %p183 = por %p181, %p182
    %p184 = scmp.ne.s32.totalorder %s170, %s171
    %p185 = scmp.eq.s32.totalorder %s21, 1
    %p186 = por %p184, %p185
    %p188 = scmp.ne.s32.totalorder %s171, %s187
    %p189 = scmp.eq.s32.totalorder %s21, 0
    %p190 = por %p188, %p189
    %s191 = ssub.s32 %s23, %s30
    %p192 = scmp.eq.s32.totalorder %s191, 0
    %s194 = sadd.s32 %s193, 1
    %s195 = scalar_select %p192, %s193, %s194
    %p198 = pneg %p192
    %p199 = scmp.eq.s32.totalorder %s15, 1
    %p200 = por %p198, %p199
    %p201 = scmp.ne.s32.totalorder %s193, %s196
    %p202 = scmp.eq.s32.totalorder %s15, 0
    %p203 = por %p201, %p202
    %p204 = scmp.ne.s32.totalorder %s193, %s196
    %p205 = scmp.eq.s32.totalorder %s20, 1
    %p206 = por %p204, %p205
    %p207 = scmp.ne.s32.totalorder %s196, %s197
    %p208 = scmp.eq.s32.totalorder %s20, 0
    %p209 = por %p207, %p208
    %p210 = scmp.ne.s32.totalorder %s196, %s197
    %p211 = scmp.eq.s32.totalorder %s21, 1
    %p212 = por %p210, %p211
    %p214 = scmp.ne.s32.totalorder %s197, %s213
    %p215 = scmp.eq.s32.totalorder %s21, 0
    %p216 = por %p214, %p215
    %s217 = ssub.s32 %s23, %s30
    %p218 = scmp.eq.s32.totalorder %s217, 0
    %s220 = sadd.s32 %s219, 1
    %s221 = scalar_select %p218, %s219, %s220
    %p224 = pneg %p218
    %p225 = scmp.eq.s32.totalorder %s15, 1
    %p226 = por %p224, %p225
    %p227 = scmp.ne.s32.totalorder %s219, %s222
    %p228 = scmp.eq.s32.totalorder %s15, 0
    %p229 = por %p227, %p228
    %p230 = scmp.ne.s32.totalorder %s219, %s222
    %p231 = scmp.eq.s32.totalorder %s20, 1
    %p232 = por %p230, %p231
    %p233 = scmp.ne.s32.totalorder %s222, %s223
    %p234 = scmp.eq.s32.totalorder %s20, 0
    %p235 = por %p233, %p234
    %p236 = scmp.ne.s32.totalorder %s222, %s223
    %p237 = scmp.eq.s32.totalorder %s21, 1
    %p238 = por %p236, %p237
    %p240 = scmp.ne.s32.totalorder %s223, %s239
    %p241 = scmp.eq.s32.totalorder %s21, 0
    %p242 = por %p240, %p241
    %s243 = ssub.s32 %s23, %s30
    %p244 = scmp.eq.s32.totalorder %s243, 0
    %s246 = sadd.s32 %s245, 1
    %s247 = scalar_select %p244, %s245, %s246
    %p250 = pneg %p244
    %p251 = scmp.eq.s32.totalorder %s15, 1
    %p252 = por %p250, %p251
    %p253 = scmp.ne.s32.totalorder %s245, %s248
    %p254 = scmp.eq.s32.totalorder %s15, 0
    %p255 = por %p253, %p254
    %p256 = scmp.ne.s32.totalorder %s245, %s248
    %p257 = scmp.eq.s32.totalorder %s20, 1
    %p258 = por %p256, %p257
    %p259 = scmp.ne.s32.totalorder %s248, %s249
    %p260 = scmp.eq.s32.totalorder %s20, 0
    %p261 = por %p259, %p260
    %p262 = scmp.ne.s32.totalorder %s248, %s249
    %p263 = scmp.eq.s32.totalorder %s21, 1
    %p264 = por %p262, %p263
    %p266 = scmp.ne.s32.totalorder %s249, %s265
    %p267 = scmp.eq.s32.totalorder %s21, 0
    %p268 = por %p266, %p267
    %s269 = ssub.s32 %s22, %s34
    %p270 = scmp.eq.s32.totalorder %s269, 0
    %s272 = sadd.s32 %s271, 1
    %s273 = scalar_select %p270, %s271, %s272
    %p276 = pneg %p270
    %p277 = scmp.eq.s32.totalorder %s15, 1
    %p278 = por %p276, %p277
    %p279 = scmp.ne.s32.totalorder %s271, %s274
    %p280 = scmp.eq.s32.totalorder %s15, 0
    %p281 = por %p279, %p280
    %p282 = scmp.ne.s32.totalorder %s271, %s274
    %p283 = scmp.eq.s32.totalorder %s20, 1
    %p284 = por %p282, %p283
    %p285 = scmp.ne.s32.totalorder %s274, %s275
    %p286 = scmp.eq.s32.totalorder %s20, 0
    %p287 = por %p285, %p286
    %p288 = scmp.ne.s32.totalorder %s274, %s275
    %p289 = scmp.eq.s32.totalorder %s21, 1
    %p290 = por %p288, %p289
    %p292 = scmp.ne.s32.totalorder %s275, %s291
    %p293 = scmp.eq.s32.totalorder %s21, 0
    %p294 = por %p292, %p293
    %p295 = scmp.le.s32.totalorder 1, %s15
    %p296 = scmp.lt.s32.totalorder %s15, 3
    %p297 = pnand %p295, %p296
    %p298 = pneg %p297
    // Predicated region
    $region9: #{tpu_custom_call.1} parent=5 // pred_check
      _
    $region10: #{tpu_custom_call.1} parent=5 // pred_check_branch
      %300 = sbr.rel (%p297) target = $region12
    $region11: #{tpu_custom_call.1} parent=5 // pred_region
      %s301 = ssub.s32 %s15, 1
      // Predicated region
      $region13: #{tpu_custom_call.1} parent=11 // pred_check
        %p302 = pneg %p53
      $region14: #{tpu_custom_call.1} parent=11 // pred_check_branch
        %304 = sbr.rel (%p302) target = $region16
      $region15: #{tpu_custom_call.1} parent=11 // pred_region
        %s305 = smul.u32 16, %s24
        %p306 = scmp.lt.s32.totalorder %s305, 15
        %s307 = scalar_select %p306, %s305, 15
        %s308 = smul.addr %s307, 8
        %s309 = scalar_lea.vmem %s0, %s308
        %s310 = smul.u32 16, %s24
      $region16: #{tpu_custom_call.1} parent=11 // pred_fallthru
        _
      // Predicated region
      $region17: #{tpu_custom_call.1} parent=11 // pred_check
        %p311 = pneg %p79
      $region18: #{tpu_custom_call.1} parent=11 // pred_check_branch
        %313 = sbr.rel (%p311) target = $region20
      $region19: #{tpu_custom_call.1} parent=11 // pred_region
        %s314 = smul.u32 16, %s24
        %p315 = scmp.lt.s32.totalorder %s314, 15
        %s316 = scalar_select %p315, %s314, 15
        %s317 = smul.addr %s316, 8
        %s318 = scalar_lea.vmem %s1, %s317
        %s319 = smul.u32 16, %s24
      $region20: #{tpu_custom_call.1} parent=11 // pred_fallthru
        _
    $region12: #{tpu_custom_call.1} parent=5 // pred_fallthru
      _
    %p320 = scmp.lt.s32.totalorder %s15, 2
    // Predicated region
    $region21: #{tpu_custom_call.1} parent=5 // pred_check
      %p321 = pneg %p320
    $region22: #{tpu_custom_call.1} parent=5 // pred_check_branch
      %323 = sbr.rel (%p321) target = $region24
    $region23: #{tpu_custom_call.1} parent=5 // pred_region
      // Predicated region
      $region25: #{tpu_custom_call.1} parent=23 // pred_check
        %p324 = pneg %p99
      $region26: #{tpu_custom_call.1} parent=23 // pred_check_branch
        %326 = sbr.rel (%p324) target = $region28
      $region27: #{tpu_custom_call.1} parent=23 // pred_region
        %p327 = scmp.lt.s32.totalorder %s23, 1
        %s328 = scalar_select %p327, %s23, 1
        %s329 = smul.addr %s328, 2
        %s330 = scalar_lea.vmem %s2, %s329
      $region28: #{tpu_custom_call.1} parent=23 // pred_fallthru
        _
      // Predicated region
      $region29: #{tpu_custom_call.1} parent=23 // pred_check
        %p331 = pneg %p125
      $region30: #{tpu_custom_call.1} parent=23 // pred_check_branch
        %333 = sbr.rel (%p331) target = $region32
      $region31: #{tpu_custom_call.1} parent=23 // pred_region
        %p334 = scmp.lt.s32.totalorder %s23, 1
        %s335 = scalar_select %p334, %s23, 1
        %s336 = smul.addr %s335, 2
        %s337 = scalar_lea.vmem %s3, %s336
      $region32: #{tpu_custom_call.1} parent=23 // pred_fallthru
        _
      // Predicated region
      $region33: #{tpu_custom_call.1} parent=23 // pred_check
        %p338 = pneg %p151
      $region34: #{tpu_custom_call.1} parent=23 // pred_check_branch
        %340 = sbr.rel (%p338) target = $region36
      $region35: #{tpu_custom_call.1} parent=23 // pred_region
        %p341 = scmp.lt.s32.totalorder %s23, 1
        %s342 = scalar_select %p341, %s23, 1
        %s343 = smul.addr %s342, 32
        %s344 = smul.addr %s343, 4
        %s345 = scalar_lea.vmem %s4, %s344
      $region36: #{tpu_custom_call.1} parent=23 // pred_fallthru
        _
      // Predicated region
      $region37: #{tpu_custom_call.1} parent=23 // pred_check
        %p346 = pneg %p177
      $region38: #{tpu_custom_call.1} parent=23 // pred_check_branch
        %348 = sbr.rel (%p346) target = $region40
      $region39: #{tpu_custom_call.1} parent=23 // pred_region
        %p349 = scmp.lt.s32.totalorder %s23, 1
        %s350 = scalar_select %p349, %s23, 1
        %s351 = smul.addr %s350, 8
        %s352 = smul.addr %s351, 4
        %s353 = scalar_lea.vmem %s5, %s352
      $region40: #{tpu_custom_call.1} parent=23 // pred_fallthru
        _
      // Predicated region
      $region41: #{tpu_custom_call.1} parent=23 // pred_check
        %p354 = pneg %p203
      $region42: #{tpu_custom_call.1} parent=23 // pred_check_branch
        %356 = sbr.rel (%p354) target = $region44
      $region43: #{tpu_custom_call.1} parent=23 // pred_region
        %p357 = scmp.lt.s32.totalorder %s23, 1
        %s358 = scalar_select %p357, %s23, 1
        %s359 = scalar_lea.vmem %s6, %s358
      $region44: #{tpu_custom_call.1} parent=23 // pred_fallthru
        _
      // Predicated region
      $region45: #{tpu_custom_call.1} parent=23 // pred_check
        %p360 = pneg %p229
      $region46: #{tpu_custom_call.1} parent=23 // pred_check_branch
        %362 = sbr.rel (%p360) target = $region48
      $region47: #{tpu_custom_call.1} parent=23 // pred_region
        %p363 = scmp.lt.s32.totalorder %s23, 1
        %s364 = scalar_select %p363, %s23, 1
        %s365 = smul.addr %s364, 32
        %s366 = smul.addr %s365, 4
        %s367 = scalar_lea.vmem %s7, %s366
      $region48: #{tpu_custom_call.1} parent=23 // pred_fallthru
        _
      // Predicated region
      $region49: #{tpu_custom_call.1} parent=23 // pred_check
        %p368 = pneg %p255
      $region50: #{tpu_custom_call.1} parent=23 // pred_check_branch
        %370 = sbr.rel (%p368) target = $region52
      $region51: #{tpu_custom_call.1} parent=23 // pred_region
        %p371 = scmp.lt.s32.totalorder %s23, 1
        %s372 = scalar_select %p371, %s23, 1
        %s373 = smul.addr %s372, 2
        %s374 = scalar_lea.vmem %s8, %s373
      $region52: #{tpu_custom_call.1} parent=23 // pred_fallthru
        _
    $region24: #{tpu_custom_call.1} parent=5 // pred_fallthru
      _
    %p375 = scmp.le.s32.totalorder 1, %s15
    %p376 = scmp.lt.s32.totalorder %s15, 3
    %p377 = pnand %p375, %p376
    %p378 = pneg %p377
    // Predicated region
    $region53: #{tpu_custom_call.1} parent=5 // pred_check
      _
    $region54: #{tpu_custom_call.1} parent=5 // pred_check_branch
      %380 = sbr.rel (%p377) target = $region56
    $region55: #{tpu_custom_call.1} parent=5 // pred_region
      %s381 = ssub.s32 %s15, 1
      %s382 = smul.u32 16, %s24
      %p383 = scmp.lt.s32.totalorder %s382, 15
      %s384 = scalar_select %p383, %s382, 15
      %s385 = smul.addr %s384, 8
      %s386 = scalar_lea.vmem %s0, %s385
      %p387 = pneg %p53
      %p388 = pneg %p50
      %s389 = smul.u32 16, %s24
      %p390 = scmp.lt.s32.totalorder %s389, 15
      %s391 = scalar_select %p390, %s389, 15
      %s392 = smul.addr %s391, 8
      %s393 = scalar_lea.vmem %s1, %s392
      %p394 = pneg %p79
      %p395 = pneg %p76
      %p396 = scmp.lt.s32.totalorder %s25, 1
      %s397 = scalar_select %p396, %s25, 1
      %s398 = smul.addr %s397, 2
      %s399 = scalar_lea.vmem %s2, %s398
      %p400 = pneg %p105
      %p401 = pneg %p102
      %p402 = scmp.lt.s32.totalorder %s25, 1
      %s403 = scalar_select %p402, %s25, 1
      %s404 = smul.addr %s403, 2
      %s405 = scalar_lea.vmem %s3, %s404
      %p406 = pneg %p131
      %p407 = pneg %p128
      %p408 = scmp.lt.s32.totalorder %s25, 1
      %s409 = scalar_select %p408, %s25, 1
      %s410 = smul.addr %s409, 32
      %s411 = smul.addr %s410, 4
      %s412 = scalar_lea.vmem %s4, %s411
      %p413 = pneg %p157
      %p414 = pneg %p154
      %p415 = scmp.lt.s32.totalorder %s25, 1
      %s416 = scalar_select %p415, %s25, 1
      %s417 = smul.addr %s416, 8
      %s418 = smul.addr %s417, 4
      %s419 = scalar_lea.vmem %s5, %s418
      %p420 = pneg %p183
      %p421 = pneg %p180
      %p422 = scmp.lt.s32.totalorder %s25, 1
      %s423 = scalar_select %p422, %s25, 1
      %s424 = scalar_lea.vmem %s6, %s423
      %p425 = pneg %p209
      %p426 = pneg %p206
      %p427 = scmp.lt.s32.totalorder %s25, 1
      %s428 = scalar_select %p427, %s25, 1
      %s429 = smul.addr %s428, 32
      %s430 = smul.addr %s429, 4
      %s431 = scalar_lea.vmem %s7, %s430
      %p432 = pneg %p235
      %p433 = pneg %p232
      %p434 = scmp.lt.s32.totalorder %s25, 1
      %s435 = scalar_select %p434, %s25, 1
      %s436 = smul.addr %s435, 2
      %s437 = scalar_lea.vmem %s8, %s436
      %p438 = pneg %p261
      %p439 = pneg %p258
      %p440 = pneg %p287
      %p441 = pneg %p284
      %s442 = smul.u32 16, %s24
      %p443 = scmp.lt.s32.totalorder %s442, 15
      %s444 = scalar_select %p443, %s442, 15
      %s445 = smul.addr %s444, 8
      %s446 = scalar_lea.vmem %s9, %s445
      %s447 = smul.u32 16, %s24
      %p448 = scmp.lt.s32.totalorder %s447, 15
      %s449 = scalar_select %p448, %s447, 15
      %s450 = smul.addr %s449, 8
      %s451 = scalar_lea.vmem %s0, %s450
      %s452 = smul.u32 16, %s24
      %s453 = smul.u32 16, %s24
      %p454 = scmp.lt.s32.totalorder %s453, 15
      %s455 = scalar_select %p454, %s453, 15
      %s456 = smul.addr %s455, 8
      %s457 = scalar_lea.vmem %s1, %s456
      %s458 = smul.u32 16, %s24
      %p459 = scmp.lt.s32.totalorder %s25, 1
      %s460 = scalar_select %p459, %s25, 1
      %s461 = smul.addr %s460, 2
      %s462 = scalar_lea.vmem %s2, %s461
      %p463 = scmp.lt.s32.totalorder %s25, 1
      %s464 = scalar_select %p463, %s25, 1
      %s465 = smul.addr %s464, 2
      %s466 = scalar_lea.vmem %s3, %s465
      %p467 = scmp.lt.s32.totalorder %s25, 1
      %s468 = scalar_select %p467, %s25, 1
      %s469 = smul.addr %s468, 32
      %s470 = smul.addr %s469, 4
      %s471 = scalar_lea.vmem %s4, %s470
      %p472 = scmp.lt.s32.totalorder %s25, 1
      %s473 = scalar_select %p472, %s25, 1
      %s474 = smul.addr %s473, 8
      %s475 = smul.addr %s474, 4
      %s476 = scalar_lea.vmem %s5, %s475
      %p477 = scmp.lt.s32.totalorder %s25, 1
      %s478 = scalar_select %p477, %s25, 1
      %s479 = scalar_lea.vmem %s6, %s478
      %p480 = scmp.lt.s32.totalorder %s25, 1
      %s481 = scalar_select %p480, %s25, 1
      %s482 = smul.addr %s481, 32
      %s483 = smul.addr %s482, 4
      %s484 = scalar_lea.vmem %s7, %s483
      %p485 = scmp.lt.s32.totalorder %s25, 1
      %s486 = scalar_select %p485, %s25, 1
      %s487 = smul.addr %s486, 2
      %s488 = scalar_lea.vmem %s8, %s487
      %s489 = smul.u32 16, %s24
      %p490 = scmp.lt.s32.totalorder %s489, 15
      %s491 = scalar_select %p490, %s489, 15
      %s492 = smul.addr %s491, 8
      %s493 = scalar_lea.vmem %s9, %s492
      %s494 = smul.u32 16, %s24
      %p496 = scmp.eq.s32.totalorder %s25, 0
      // Predicated region
      $region57: #{tpu_custom_call.1} parent=55 // pred_check
        %p497 = pneg %p496
      $region58: #{tpu_custom_call.1} parent=55 // pred_check_branch
        %499 = sbr.rel (%p497) target = $region60
      $region59: #{tpu_custom_call.1} parent=55 // pred_region
        %v500 = vld [vmem:[%s451] sm:$0xff]
        %v501 = vld [vmem:[%s451 + $0x8] sm:$0xff]
        %v502 = vld [vmem:[%s451 + $0x10] sm:$0xff]
        %v503 = vld [vmem:[%s451 + $0x18] sm:$0xff]
        %v504 = vld [vmem:[%s451 + $0x20] sm:$0xff]
        %v505 = vld [vmem:[%s451 + $0x28] sm:$0xff]
        %v506 = vld [vmem:[%s451 + $0x30] sm:$0xff]
        %v507 = vld [vmem:[%s451 + $0x38] sm:$0xff]
        %v508 = vld [vmem:[%s451 + $0x40] sm:$0xff]
        %v509 = vld [vmem:[%s451 + $0x48] sm:$0xff]
        %v510 = vld [vmem:[%s451 + $0x50] sm:$0xff]
        %v511 = vld [vmem:[%s451 + $0x58] sm:$0xff]
        %v512 = vld [vmem:[%s451 + $0x60] sm:$0xff]
        %v513 = vld [vmem:[%s451 + $0x68] sm:$0xff]
        %v514 = vld [vmem:[%s451 + $0x70] sm:$0xff]
        %v515 = vld [vmem:[%s451 + $0x78] sm:$0xff]
        %vm516 = vcmask 523264
        %517 = vst.msk [vmem:[#allocation2] sm:$0xff] %vm516, %v500
        %518 = vst.msk [vmem:[#allocation2 + $0x8] sm:$0xff] %vm516, %v501
        %519 = vst.msk [vmem:[#allocation2 + $0x10] sm:$0xff] %vm516, %v502
        %520 = vst.msk [vmem:[#allocation2 + $0x18] sm:$0xff] %vm516, %v503
        %521 = vst.msk [vmem:[#allocation2 + $0x20] sm:$0xff] %vm516, %v504
        %522 = vst.msk [vmem:[#allocation2 + $0x28] sm:$0xff] %vm516, %v505
        %523 = vst.msk [vmem:[#allocation2 + $0x30] sm:$0xff] %vm516, %v506
        %524 = vst.msk [vmem:[#allocation2 + $0x38] sm:$0xff] %vm516, %v507
        %525 = vst.msk [vmem:[#allocation2 + $0x40] sm:$0xff] %vm516, %v508
        %526 = vst.msk [vmem:[#allocation2 + $0x48] sm:$0xff] %vm516, %v509
        %527 = vst.msk [vmem:[#allocation2 + $0x50] sm:$0xff] %vm516, %v510
        %528 = vst.msk [vmem:[#allocation2 + $0x58] sm:$0xff] %vm516, %v511
        %529 = vst.msk [vmem:[#allocation2 + $0x60] sm:$0xff] %vm516, %v512
        %530 = vst.msk [vmem:[#allocation2 + $0x68] sm:$0xff] %vm516, %v513
        %531 = vst.msk [vmem:[#allocation2 + $0x70] sm:$0xff] %vm516, %v514
        %532 = vst.msk [vmem:[#allocation2 + $0x78] sm:$0xff] %vm516, %v515
        %v533 = vld [vmem:[%s457] sm:$0xff]
        %v534 = vld [vmem:[%s457 + $0x8] sm:$0xff]
        %v535 = vld [vmem:[%s457 + $0x10] sm:$0xff]
        %v536 = vld [vmem:[%s457 + $0x18] sm:$0xff]
        %v537 = vld [vmem:[%s457 + $0x20] sm:$0xff]
        %v538 = vld [vmem:[%s457 + $0x28] sm:$0xff]
        %v539 = vld [vmem:[%s457 + $0x30] sm:$0xff]
        %v540 = vld [vmem:[%s457 + $0x38] sm:$0xff]
        %v541 = vld [vmem:[%s457 + $0x40] sm:$0xff]
        %v542 = vld [vmem:[%s457 + $0x48] sm:$0xff]
        %v543 = vld [vmem:[%s457 + $0x50] sm:$0xff]
        %v544 = vld [vmem:[%s457 + $0x58] sm:$0xff]
        %v545 = vld [vmem:[%s457 + $0x60] sm:$0xff]
        %v546 = vld [vmem:[%s457 + $0x68] sm:$0xff]
        %v547 = vld [vmem:[%s457 + $0x70] sm:$0xff]
        %v548 = vld [vmem:[%s457 + $0x78] sm:$0xff]
        %549 = vst.msk [vmem:[#allocation3] sm:$0xff] %vm516, %v533
        %550 = vst.msk [vmem:[#allocation3 + $0x8] sm:$0xff] %vm516, %v534
        %551 = vst.msk [vmem:[#allocation3 + $0x10] sm:$0xff] %vm516, %v535
        %552 = vst.msk [vmem:[#allocation3 + $0x18] sm:$0xff] %vm516, %v536
        %553 = vst.msk [vmem:[#allocation3 + $0x20] sm:$0xff] %vm516, %v537
        %554 = vst.msk [vmem:[#allocation3 + $0x28] sm:$0xff] %vm516, %v538
        %555 = vst.msk [vmem:[#allocation3 + $0x30] sm:$0xff] %vm516, %v539
        %556 = vst.msk [vmem:[#allocation3 + $0x38] sm:$0xff] %vm516, %v540
        %557 = vst.msk [vmem:[#allocation3 + $0x40] sm:$0xff] %vm516, %v541
        %558 = vst.msk [vmem:[#allocation3 + $0x48] sm:$0xff] %vm516, %v542
        %559 = vst.msk [vmem:[#allocation3 + $0x50] sm:$0xff] %vm516, %v543
        %560 = vst.msk [vmem:[#allocation3 + $0x58] sm:$0xff] %vm516, %v544
        %561 = vst.msk [vmem:[#allocation3 + $0x60] sm:$0xff] %vm516, %v545
        %562 = vst.msk [vmem:[#allocation3 + $0x68] sm:$0xff] %vm516, %v546
        %563 = vst.msk [vmem:[#allocation3 + $0x70] sm:$0xff] %vm516, %v547
        %564 = vst.msk [vmem:[#allocation3 + $0x78] sm:$0xff] %vm516, %v548
        %vm565 = vcmask 7168
        %566 = vst.msk [vmem:[#allocation4] sm:$0xff] %vm565, 0.0
        %567 = vst.msk [vmem:[#allocation4 + $0x8] sm:$0xff] %vm565, 0.0
        %568 = vst.msk [vmem:[#allocation4 + $0x10] sm:$0xff] %vm565, 0.0
        %569 = vst.msk [vmem:[#allocation4 + $0x18] sm:$0xff] %vm565, 0.0
        %570 = vst.msk [vmem:[#allocation4 + $0x20] sm:$0xff] %vm565, 0.0
        %571 = vst.msk [vmem:[#allocation4 + $0x28] sm:$0xff] %vm565, 0.0
        %572 = vst.msk [vmem:[#allocation4 + $0x30] sm:$0xff] %vm565, 0.0
        %573 = vst.msk [vmem:[#allocation4 + $0x38] sm:$0xff] %vm565, 0.0
        %574 = vst.msk [vmem:[#allocation4 + $0x40] sm:$0xff] %vm565, 0.0
        %575 = vst.msk [vmem:[#allocation4 + $0x48] sm:$0xff] %vm565, 0.0
        %576 = vst.msk [vmem:[#allocation4 + $0x50] sm:$0xff] %vm565, 0.0
        %577 = vst.msk [vmem:[#allocation4 + $0x58] sm:$0xff] %vm565, 0.0
        %578 = vst.msk [vmem:[#allocation4 + $0x60] sm:$0xff] %vm565, 0.0
        %579 = vst.msk [vmem:[#allocation4 + $0x68] sm:$0xff] %vm565, 0.0
        %580 = vst.msk [vmem:[#allocation4 + $0x70] sm:$0xff] %vm565, 0.0
        %581 = vst.msk [vmem:[#allocation4 + $0x78] sm:$0xff] %vm565, 0.0
      $region60: #{tpu_custom_call.1} parent=55 // pred_fallthru
        _
      %v582 = vld [vmem:[%s462] sm:$0x3]
      %v583 = vld [vmem:[%s466] sm:$0x3]
      %v584 = vld [vmem:[#allocation2] sm:$0xff]
      %v585 = vld [vmem:[#allocation2 + $0x8] sm:$0xff]
      %v586 = vld [vmem:[#allocation2 + $0x10] sm:$0xff]
      %v587 = vld [vmem:[#allocation2 + $0x18] sm:$0xff]
      %v588 = vld [vmem:[#allocation2 + $0x20] sm:$0xff]
      %v589 = vld [vmem:[#allocation2 + $0x28] sm:$0xff]
      %v590 = vld [vmem:[#allocation2 + $0x30] sm:$0xff]
      %v591 = vld [vmem:[#allocation2 + $0x38] sm:$0xff]
      %v592 = vld [vmem:[#allocation2 + $0x40] sm:$0xff]
      %v593 = vld [vmem:[#allocation2 + $0x48] sm:$0xff]
      %v594 = vld [vmem:[#allocation2 + $0x50] sm:$0xff]
      %v595 = vld [vmem:[#allocation2 + $0x58] sm:$0xff]
      %v596 = vld [vmem:[#allocation2 + $0x60] sm:$0xff]
      %v597 = vld [vmem:[#allocation2 + $0x68] sm:$0xff]
      %v598 = vld [vmem:[#allocation2 + $0x70] sm:$0xff]
      %v599 = vld [vmem:[#allocation2 + $0x78] sm:$0xff]
      %v600 = vlaneseq
      %v601 = vshrl.u32 %v600, 7
      %v602 = vsub.s32 0, %v601
      %v603 = vrot.slane %v583, %v602
      %v604 = vadd.f32 %v584, %v603
      %v605 = vadd.f32 %v585, %v603
      %v606 = vadd.f32 %v586, %v603
      %v607 = vadd.f32 %v587, %v603
      %v608 = vadd.f32 %v588, %v603
      %v609 = vadd.f32 %v589, %v603
      %v610 = vadd.f32 %v590, %v603
      %v611 = vadd.f32 %v591, %v603
      %v612 = vadd.f32 %v592, %v603
      %v613 = vadd.f32 %v593, %v603
      %v614 = vadd.f32 %v594, %v603
      %v615 = vadd.f32 %v595, %v603
      %v616 = vadd.f32 %v596, %v603
      %v617 = vadd.f32 %v597, %v603
      %v618 = vadd.f32 %v598, %v603
      %v619 = vadd.f32 %v599, %v603
      %v620 = vlaneseq
      %v621 = vshrl.u32 %v620, 7
      %v622 = vsub.s32 0, %v621
      %v623 = vrot.slane %v582, %v622
      %v624 = vmul.f32 %v604, %v623
      %v625 = vmul.f32 %v605, %v623
      %v626 = vmul.f32 %v606, %v623
      %v627 = vmul.f32 %v607, %v623
      %v628 = vmul.f32 %v608, %v623
      %v629 = vmul.f32 %v609, %v623
      %v630 = vmul.f32 %v610, %v623
      %v631 = vmul.f32 %v611, %v623
      %v632 = vmul.f32 %v612, %v623
      %v633 = vmul.f32 %v613, %v623
      %v634 = vmul.f32 %v614, %v623
      %v635 = vmul.f32 %v615, %v623
      %v636 = vmul.f32 %v616, %v623
      %v637 = vmul.f32 %v617, %v623
      %v638 = vmul.f32 %v618, %v623
      %v639 = vmul.f32 %v619, %v623
      %v640 = vld [vmem:[#allocation3] sm:$0xff]
      %v641 = vld [vmem:[#allocation3 + $0x8] sm:$0xff]
      %v642 = vld [vmem:[#allocation3 + $0x10] sm:$0xff]
      %v643 = vld [vmem:[#allocation3 + $0x18] sm:$0xff]
      %v644 = vld [vmem:[#allocation3 + $0x20] sm:$0xff]
      %v645 = vld [vmem:[#allocation3 + $0x28] sm:$0xff]
      %v646 = vld [vmem:[#allocation3 + $0x30] sm:$0xff]
      %v647 = vld [vmem:[#allocation3 + $0x38] sm:$0xff]
      %v648 = vld [vmem:[#allocation3 + $0x40] sm:$0xff]
      %v649 = vld [vmem:[#allocation3 + $0x48] sm:$0xff]
      %v650 = vld [vmem:[#allocation3 + $0x50] sm:$0xff]
      %v651 = vld [vmem:[#allocation3 + $0x58] sm:$0xff]
      %v652 = vld [vmem:[#allocation3 + $0x60] sm:$0xff]
      %v653 = vld [vmem:[#allocation3 + $0x68] sm:$0xff]
      %v654 = vld [vmem:[#allocation3 + $0x70] sm:$0xff]
      %v655 = vld [vmem:[#allocation3 + $0x78] sm:$0xff]
      %v656 = vlaneseq
      %v657 = vshrl.u32 %v656, 7
      %v658 = vsub.s32 1, %v657
      %v659 = vrot.slane %v583, %v658
      %v660 = vadd.f32 %v640, %v659
      %v661 = vadd.f32 %v641, %v659
      %v662 = vadd.f32 %v642, %v659
      %v663 = vadd.f32 %v643, %v659
      %v664 = vadd.f32 %v644, %v659
      %v665 = vadd.f32 %v645, %v659
      %v666 = vadd.f32 %v646, %v659
      %v667 = vadd.f32 %v647, %v659
      %v668 = vadd.f32 %v648, %v659
      %v669 = vadd.f32 %v649, %v659
      %v670 = vadd.f32 %v650, %v659
      %v671 = vadd.f32 %v651, %v659
      %v672 = vadd.f32 %v652, %v659
      %v673 = vadd.f32 %v653, %v659
      %v674 = vadd.f32 %v654, %v659
      %v675 = vadd.f32 %v655, %v659
      %v676 = vlaneseq
      %v677 = vshrl.u32 %v676, 7
      %v678 = vsub.s32 1, %v677
      %v679 = vrot.slane %v582, %v678
      %v680 = vmul.f32 %v660, %v679
      %v681 = vmul.f32 %v661, %v679
      %v682 = vmul.f32 %v662, %v679
      %v683 = vmul.f32 %v663, %v679
      %v684 = vmul.f32 %v664, %v679
      %v685 = vmul.f32 %v665, %v679
      %v686 = vmul.f32 %v666, %v679
      %v687 = vmul.f32 %v667, %v679
      %v688 = vmul.f32 %v668, %v679
      %v689 = vmul.f32 %v669, %v679
      %v690 = vmul.f32 %v670, %v679
      %v691 = vmul.f32 %v671, %v679
      %v692 = vmul.f32 %v672, %v679
      %v693 = vmul.f32 %v673, %v679
      %v694 = vmul.f32 %v674, %v679
      %v695 = vmul.f32 %v675, %v679
      %v696 = vpack.c.bf16 %v625, %v624
      %v697 = vpack.c.bf16 %v627, %v626
      %v698 = vpack.c.bf16 %v629, %v628
      %v699 = vpack.c.bf16 %v631, %v630
      %v700 = vpack.c.bf16 %v633, %v632
      %v701 = vpack.c.bf16 %v635, %v634
      %v702 = vpack.c.bf16 %v637, %v636
      %v703 = vpack.c.bf16 %v639, %v638
      %v704 = vpack.c.bf16 %v681, %v680
      %v705 = vpack.c.bf16 %v683, %v682
      %v706 = vpack.c.bf16 %v685, %v684
      %v707 = vpack.c.bf16 %v687, %v686
      %v708 = vpack.c.bf16 %v689, %v688
      %v709 = vpack.c.bf16 %v691, %v690
      %v710 = vpack.c.bf16 %v693, %v692
      %v711 = vpack.c.bf16 %v695, %v694
      %v712 = vld [vmem:[%s471] sm:$0xf]
      %v713 = vld [vmem:[%s471 + $0x4] sm:$0xf]
      %v714 = vld [vmem:[%s471 + $0x8] sm:$0xf]
      %v715 = vld [vmem:[%s471 + $0xc] sm:$0xf]
      %v716 = vld [vmem:[%s471 + $0x10] sm:$0xf]
      %v717 = vld [vmem:[%s471 + $0x14] sm:$0xf]
      %v718 = vld [vmem:[%s471 + $0x18] sm:$0xf]
      %v719 = vld [vmem:[%s471 + $0x1c] sm:$0xf]
      %s720 = scalar_lea.vmem %s471, 64
      %v721 = vld [vmem:[%s720] sm:$0xf]
      %v722 = vld [vmem:[%s720 + $0x4] sm:$0xf]
      %v723 = vld [vmem:[%s720 + $0x8] sm:$0xf]
      %v724 = vld [vmem:[%s720 + $0xc] sm:$0xf]
      %v725 = vld [vmem:[%s720 + $0x10] sm:$0xf]
      %v726 = vld [vmem:[%s720 + $0x14] sm:$0xf]
      %v727 = vld [vmem:[%s720 + $0x18] sm:$0xf]
      %v728 = vld [vmem:[%s720 + $0x1c] sm:$0xf]
      %v737 = vunpack.c.l.b16 %v721
      %v738 = vunpack.c.l.b16 %v722
      %v739 = vunpack.c.l.b16 %v723
      %v740 = vunpack.c.l.b16 %v724
      %v741 = vunpack.c.l.b16 %v725
      %v742 = vunpack.c.l.b16 %v726
      %v743 = vunpack.c.l.b16 %v727
      %v744 = vunpack.c.l.b16 %v728
      %v745 = vpack.c.b16 %v738, %v737
      %v746 = vpack.c.b16 %v740, %v739
      %v747 = vpack.c.b16 %v742, %v741
      %v748 = vpack.c.b16 %v744, %v743
      %vm753 = vcmask 523264
      %v755 = vsel %vm753, %v704, 0
      %v758 = vsel %vm753, %v705, 0
      %v761 = vsel %vm753, %v706, 0
      %v764 = vsel %vm753, %v707, 0
      %v767 = vsel %vm753, %v708, 0
      %v770 = vsel %vm753, %v709, 0
      %v773 = vsel %vm753, %v710, 0
      %v776 = vsel %vm753, %v711, 0
      %778 = vmatprep.subr.bf16.mxu0 0
      %779 = vmatpush1.bf16.msra.mxu0 %v745
      %780 = vmatprep.subr.bf16.mxu0 0
      %781 = vmatpush1.bf16.msra.mxu0 %v746
      %782 = vmatprep.subr.bf16.mxu0 0
      %783 = vmatpush1.bf16.msra.mxu0 %v747
      %784 = vmatprep.subr.bf16.mxu0 0
      %785 = vmatpush1.bf16.msra.mxu0 %v748
      %786 = vmatprep.subr.bf16.mxu0 0
      %787 = vmatpush1.bf16.msra.mxu0 0
      %788 = vmatprep.subr.bf16.mxu0 0
      %789 = vmatpush1.bf16.msra.mxu0 0
      %790 = vmatprep.subr.bf16.mxu0 0
      %791 = vmatpush1.bf16.msra.mxu0 0
      %792 = vmatprep.subr.bf16.mxu0 0
      %793 = vmatpush1.bf16.msra.mxu0 0
      %794 = vmatprep.subr.bf16.mxu0 0
      %795 = vmatpush1.bf16.msra.mxu0 0
      %796 = vmatprep.subr.bf16.mxu0 0
      %797 = vmatpush1.bf16.msra.mxu0 0
      %798 = vmatprep.subr.bf16.mxu0 0
      %799 = vmatpush1.bf16.msra.mxu0 0
      %800 = vmatprep.subr.bf16.mxu0 0
      %801 = vmatpush1.bf16.msra.mxu0 0
      %802 = vmatprep.subr.bf16.mxu0 0
      %803 = vmatpush1.bf16.msra.mxu0 0
      %804 = vmatprep.subr.bf16.mxu0 0
      %805 = vmatpush1.bf16.msra.mxu0 0
      %806 = vmatprep.subr.bf16.mxu0 0
      %807 = vmatpush1.bf16.msra.mxu0 0
      %808 = vmatprep.subr.bf16.mxu0 0
      %809 = vmatpush1.bf16.msra.mxu0 0
      %810 = vmatprep.mubr.bf16.mxu0 0
      %811 = vmatmul.mubr.bf16.gmra.mrb[0].mxu0 %v755
      %v812 = vpop.f32.mrb[0].mxu0
      %v813 = vadd.f32 0.0, %v812
      %v814 = vpop.f32.mrb[0].mxu0
      %v815 = vpop.f32.mrb[0].mxu0
      %v816 = vadd.f32 0.0, %v815
      %v817 = vpop.f32.mrb[0].mxu0
      %818 = vmatprep.mubr.bf16.mxu0 0
      %819 = vmatmul.mubr.bf16.gmra.mrb[0].mxu0 %v758
      %v820 = vpop.f32.mrb[0].mxu0
      %v821 = vadd.f32 0.0, %v820
      %v822 = vpop.f32.mrb[0].mxu0
      %v823 = vpop.f32.mrb[0].mxu0
      %v824 = vadd.f32 0.0, %v823
      %v825 = vpop.f32.mrb[0].mxu0
      %826 = vmatprep.mubr.bf16.mxu0 0
      %827 = vmatmul.mubr.bf16.gmra.mrb[0].mxu0 %v761
      %v828 = vpop.f32.mrb[0].mxu0
      %v829 = vadd.f32 0.0, %v828
      %v830 = vpop.f32.mrb[0].mxu0
      %v831 = vpop.f32.mrb[0].mxu0
      %v832 = vadd.f32 0.0, %v831
      %v833 = vpop.f32.mrb[0].mxu0
      %834 = vmatprep.mubr.bf16.mxu0 0
      %835 = vmatmul.mubr.bf16.gmra.mrb[0].mxu0 %v764
      %v836 = vpop.f32.mrb[0].mxu0
      %v837 = vadd.f32 0.0, %v836
      %v838 = vpop.f32.mrb[0].mxu0
      %v839 = vpop.f32.mrb[0].mxu0
      %v840 = vadd.f32 0.0, %v839
      %v841 = vpop.f32.mrb[0].mxu0
      %842 = vmatprep.mubr.bf16.mxu0 0
      %843 = vmatmul.mubr.bf16.gmra.mrb[0].mxu0 %v767
      %v844 = vpop.f32.mrb[0].mxu0
      %v845 = vadd.f32 0.0, %v844
      %v846 = vpop.f32.mrb[0].mxu0
      %v847 = vpop.f32.mrb[0].mxu0
      %v848 = vadd.f32 0.0, %v847
      %v849 = vpop.f32.mrb[0].mxu0
      %850 = vmatprep.mubr.bf16.mxu0 0
      %851 = vmatmul.mubr.bf16.gmra.mrb[0].mxu0 %v770
      %v852 = vpop.f32.mrb[0].mxu0
      %v853 = vadd.f32 0.0, %v852
      %v854 = vpop.f32.mrb[0].mxu0
      %v855 = vpop.f32.mrb[0].mxu0
      %v856 = vadd.f32 0.0, %v855
      %v857 = vpop.f32.mrb[0].mxu0
      %858 = vmatprep.mubr.bf16.mxu0 0
      %859 = vmatmul.mubr.bf16.gmra.mrb[0].mxu0 %v773
      %v860 = vpop.f32.mrb[0].mxu0
      %v861 = vadd.f32 0.0, %v860
      %v862 = vpop.f32.mrb[0].mxu0
      %v863 = vpop.f32.mrb[0].mxu0
      %v864 = vadd.f32 0.0, %v863
      %v865 = vpop.f32.mrb[0].mxu0
      %866 = vmatprep.mubr.bf16.mxu0 0
      %867 = vmatmul.mubr.bf16.gmra.mrb[0].mxu0 %v776
      %v868 = vpop.f32.mrb[0].mxu0
      %v869 = vadd.f32 0.0, %v868
      %v870 = vpop.f32.mrb[0].mxu0
      %v871 = vpop.f32.mrb[0].mxu0
      %v872 = vadd.f32 0.0, %v871
      %v873 = vpop.f32.mrb[0].mxu0
      %874 = vdwg.mxu0
      %v883 = vunpack.c.l.b16 %v712
      %v884 = vunpack.c.l.b16 %v713
      %v885 = vunpack.c.l.b16 %v714
      %v886 = vunpack.c.l.b16 %v715
      %v887 = vunpack.c.l.b16 %v716
      %v888 = vunpack.c.l.b16 %v717
      %v889 = vunpack.c.l.b16 %v718
      %v890 = vunpack.c.l.b16 %v719
      %v891 = vpack.c.b16 %v884, %v883
      %v892 = vpack.c.b16 %v886, %v885
      %v893 = vpack.c.b16 %v888, %v887
      %v894 = vpack.c.b16 %v890, %v889
      %v900 = vsel %vm753, %v696, 0
      %v903 = vsel %vm753, %v697, 0
      %v906 = vsel %vm753, %v698, 0
      %v909 = vsel %vm753, %v699, 0
      %v912 = vsel %vm753, %v700, 0
      %v915 = vsel %vm753, %v701, 0
      %v918 = vsel %vm753, %v702, 0
      %v921 = vsel %vm753, %v703, 0
      %923 = vmatprep.subr.bf16.mxu0 0
      %924 = vmatpush1.bf16.msra.mxu0 %v891
      %925 = vmatprep.subr.bf16.mxu0 0
      %926 = vmatpush1.bf16.msra.mxu0 %v892
      %927 = vmatprep.subr.bf16.mxu0 0
      %928 = vmatpush1.bf16.msra.mxu0 %v893
      %929 = vmatprep.subr.bf16.mxu0 0
      %930 = vmatpush1.bf16.msra.mxu0 %v894
      %931 = vmatprep.subr.bf16.mxu0 0
      %932 = vmatpush1.bf16.msra.mxu0 0
      %933 = vmatprep.subr.bf16.mxu0 0
      %934 = vmatpush1.bf16.msra.mxu0 0
      %935 = vmatprep.subr.bf16.mxu0 0
      %936 = vmatpush1.bf16.msra.mxu0 0
      %937 = vmatprep.subr.bf16.mxu0 0
      %938 = vmatpush1.bf16.msra.mxu0 0
      %939 = vmatprep.subr.bf16.mxu0 0
      %940 = vmatpush1.bf16.msra.mxu0 0
      %941 = vmatprep.subr.bf16.mxu0 0
      %942 = vmatpush1.bf16.msra.mxu0 0
      %943 = vmatprep.subr.bf16.mxu0 0
      %944 = vmatpush1.bf16.msra.mxu0 0
      %945 = vmatprep.subr.bf16.mxu0 0
      %946 = vmatpush1.bf16.msra.mxu0 0
      %947 = vmatprep.subr.bf16.mxu0 0
      %948 = vmatpush1.bf16.msra.mxu0 0
      %949 = vmatprep.subr.bf16.mxu0 0
      %950 = vmatpush1.bf16.msra.mxu0 0
      %951 = vmatprep.subr.bf16.mxu0 0
      %952 = vmatpush1.bf16.msra.mxu0 0
      %953 = vmatprep.subr.bf16.mxu0 0
      %954 = vmatpush1.bf16.msra.mxu0 0
      %955 = vmatprep.mubr.bf16.mxu0 0
      %956 = vmatmul.mubr.bf16.gmra.mrb[0].mxu0 %v900
      %v957 = vpop.f32.mrb[0].mxu0
      %v958 = vadd.f32 %v813, %v957
      %v959 = vpop.f32.mrb[0].mxu0
      %v960 = vpop.f32.mrb[0].mxu0
      %v961 = vadd.f32 %v816, %v960
      %v962 = vpop.f32.mrb[0].mxu0
      %963 = vmatprep.mubr.bf16.mxu0 0
      %964 = vmatmul.mubr.bf16.gmra.mrb[0].mxu0 %v903
      %v965 = vpop.f32.mrb[0].mxu0
      %v966 = vadd.f32 %v821, %v965
      %v967 = vpop.f32.mrb[0].mxu0
      %v968 = vpop.f32.mrb[0].mxu0
      %v969 = vadd.f32 %v824, %v968
      %v970 = vpop.f32.mrb[0].mxu0
      %971 = vmatprep.mubr.bf16.mxu0 0
      %972 = vmatmul.mubr.bf16.gmra.mrb[0].mxu0 %v906
      %v973 = vpop.f32.mrb[0].mxu0
      %v974 = vadd.f32 %v829, %v973
      %v975 = vpop.f32.mrb[0].mxu0
      %v976 = vpop.f32.mrb[0].mxu0
      %v977 = vadd.f32 %v832, %v976
      %v978 = vpop.f32.mrb[0].mxu0
      %979 = vmatprep.mubr.bf16.mxu0 0
      %980 = vmatmul.mubr.bf16.gmra.mrb[0].mxu0 %v909
      %v981 = vpop.f32.mrb[0].mxu0
      %v982 = vadd.f32 %v837, %v981
      %v983 = vpop.f32.mrb[0].mxu0
      %v984 = vpop.f32.mrb[0].mxu0
      %v985 = vadd.f32 %v840, %v984
      %v986 = vpop.f32.mrb[0].mxu0
      %987 = vmatprep.mubr.bf16.mxu0 0
      %988 = vmatmul.mubr.bf16.gmra.mrb[0].mxu0 %v912
      %v989 = vpop.f32.mrb[0].mxu0
      %v990 = vadd.f32 %v845, %v989
      %v991 = vpop.f32.mrb[0].mxu0
      %v992 = vpop.f32.mrb[0].mxu0
      %v993 = vadd.f32 %v848, %v992
      %v994 = vpop.f32.mrb[0].mxu0
      %995 = vmatprep.mubr.bf16.mxu0 0
      %996 = vmatmul.mubr.bf16.gmra.mrb[0].mxu0 %v915
      %v997 = vpop.f32.mrb[0].mxu0
      %v998 = vadd.f32 %v853, %v997
      %v999 = vpop.f32.mrb[0].mxu0
      %v1000 = vpop.f32.mrb[0].mxu0
      %v1001 = vadd.f32 %v856, %v1000
      %v1002 = vpop.f32.mrb[0].mxu0
      %1003 = vmatprep.mubr.bf16.mxu0 0
      %1004 = vmatmul.mubr.bf16.gmra.mrb[0].mxu0 %v918
      %v1005 = vpop.f32.mrb[0].mxu0
      %v1006 = vadd.f32 %v861, %v1005
      %v1007 = vpop.f32.mrb[0].mxu0
      %v1008 = vpop.f32.mrb[0].mxu0
      %v1009 = vadd.f32 %v864, %v1008
      %v1010 = vpop.f32.mrb[0].mxu0
      %1011 = vmatprep.mubr.bf16.mxu0 0
      %1012 = vmatmul.mubr.bf16.gmra.mrb[0].mxu0 %v921
      %v1013 = vpop.f32.mrb[0].mxu0
      %v1014 = vadd.f32 %v869, %v1013
      %v1015 = vpop.f32.mrb[0].mxu0
      %v1016 = vpop.f32.mrb[0].mxu0
      %v1017 = vadd.f32 %v872, %v1016
      %v1018 = vpop.f32.mrb[0].mxu0
      %1019 = vdwg.mxu0
      %s1020 = scalar_lea.vmem %s471, 32
      %v1021 = vld [vmem:[%s1020] sm:$0xf]
      %v1022 = vld [vmem:[%s1020 + $0x4] sm:$0xf]
      %v1023 = vld [vmem:[%s1020 + $0x8] sm:$0xf]
      %v1024 = vld [vmem:[%s1020 + $0xc] sm:$0xf]
      %v1025 = vld [vmem:[%s1020 + $0x10] sm:$0xf]
      %v1026 = vld [vmem:[%s1020 + $0x14] sm:$0xf]
      %v1027 = vld [vmem:[%s1020 + $0x18] sm:$0xf]
      %v1028 = vld [vmem:[%s1020 + $0x1c] sm:$0xf]
      %s1029 = scalar_lea.vmem %s471, 96
      %v1030 = vld [vmem:[%s1029] sm:$0xf]
      %v1031 = vld [vmem:[%s1029 + $0x4] sm:$0xf]
      %v1032 = vld [vmem:[%s1029 + $0x8] sm:$0xf]
      %v1033 = vld [vmem:[%s1029 + $0xc] sm:$0xf]
      %v1034 = vld [vmem:[%s1029 + $0x10] sm:$0xf]
      %v1035 = vld [vmem:[%s1029 + $0x14] sm:$0xf]
      %v1036 = vld [vmem:[%s1029 + $0x18] sm:$0xf]
      %v1037 = vld [vmem:[%s1029 + $0x1c] sm:$0xf]
      %v1046 = vunpack.c.l.b16 %v1030
      %v1047 = vunpack.c.l.b16 %v1031
      %v1048 = vunpack.c.l.b16 %v1032
      %v1049 = vunpack.c.l.b16 %v1033
      %v1050 = vunpack.c.l.b16 %v1034
      %v1051 = vunpack.c.l.b16 %v1035
      %v1052 = vunpack.c.l.b16 %v1036
      %v1053 = vunpack.c.l.b16 %v1037
      %v1054 = vpack.c.b16 %v1047, %v1046
      %v1055 = vpack.c.b16 %v1049, %v1048
      %v1056 = vpack.c.b16 %v1051, %v1050
      %v1057 = vpack.c.b16 %v1053, %v1052
      %1062 = vmatprep.subr.bf16.mxu0 0
      %1063 = vmatpush1.bf16.msra.mxu0 %v1054
      %1064 = vmatprep.subr.bf16.mxu0 0
      %1065 = vmatpush1.bf16.msra.mxu0 %v1055
      %1066 = vmatprep.subr.bf16.mxu0 0
      %1067 = vmatpush1.bf16.msra.mxu0 %v1056
      %1068 = vmatprep.subr.bf16.mxu0 0
      %1069 = vmatpush1.bf16.msra.mxu0 %v1057
      %1070 = vmatprep.subr.bf16.mxu0 0
      %1071 = vmatpush1.bf16.msra.mxu0 0
      %1072 = vmatprep.subr.bf16.mxu0 0
      %1073 = vmatpush1.bf16.msra.mxu0 0
      %1074 = vmatprep.subr.bf16.mxu0 0
      %1075 = vmatpush1.bf16.msra.mxu0 0
      %1076 = vmatprep.subr.bf16.mxu0 0
      %1077 = vmatpush1.bf16.msra.mxu0 0
      %1078 = vmatprep.subr.bf16.mxu0 0
      %1079 = vmatpush1.bf16.msra.mxu0 0
      %1080 = vmatprep.subr.bf16.mxu0 0
      %1081 = vmatpush1.bf16.msra.mxu0 0
      %1082 = vmatprep.subr.bf16.mxu0 0
      %1083 = vmatpush1.bf16.msra.mxu0 0
      %1084 = vmatprep.subr.bf16.mxu0 0
      %1085 = vmatpush1.bf16.msra.mxu0 0
      %1086 = vmatprep.subr.bf16.mxu0 0
      %1087 = vmatpush1.bf16.msra.mxu0 0
      %1088 = vmatprep.subr.bf16.mxu0 0
      %1089 = vmatpush1.bf16.msra.mxu0 0
      %1090 = vmatprep.subr.bf16.mxu0 0
      %1091 = vmatpush1.bf16.msra.mxu0 0
      %1092 = vmatprep.subr.bf16.mxu0 0
      %1093 = vmatpush1.bf16.msra.mxu0 0
      %1094 = vmatprep.mubr.bf16.mxu0 0
      %1095 = vmatmul.mubr.bf16.gmra.mrb[0].mxu0 %v755
      %v1096 = vpop.f32.mrb[0].mxu0
      %v1097 = vadd.f32 0.0, %v1096
      %v1098 = vpop.f32.mrb[0].mxu0
      %v1099 = vpop.f32.mrb[0].mxu0
      %v1100 = vadd.f32 0.0, %v1099
      %v1101 = vpop.f32.mrb[0].mxu0
      %1102 = vmatprep.mubr.bf16.mxu0 0
      %1103 = vmatmul.mubr.bf16.gmra.mrb[0].mxu0 %v758
      %v1104 = vpop.f32.mrb[0].mxu0
      %v1105 = vadd.f32 0.0, %v1104
      %v1106 = vpop.f32.mrb[0].mxu0
      %v1107 = vpop.f32.mrb[0].mxu0
      %v1108 = vadd.f32 0.0, %v1107
      %v1109 = vpop.f32.mrb[0].mxu0
      %1110 = vmatprep.mubr.bf16.mxu0 0
      %1111 = vmatmul.mubr.bf16.gmra.mrb[0].mxu0 %v761
      %v1112 = vpop.f32.mrb[0].mxu0
      %v1113 = vadd.f32 0.0, %v1112
      %v1114 = vpop.f32.mrb[0].mxu0
      %v1115 = vpop.f32.mrb[0].mxu0
      %v1116 = vadd.f32 0.0, %v1115
      %v1117 = vpop.f32.mrb[0].mxu0
      %1118 = vmatprep.mubr.bf16.mxu0 0
      %1119 = vmatmul.mubr.bf16.gmra.mrb[0].mxu0 %v764
      %v1120 = vpop.f32.mrb[0].mxu0
      %v1121 = vadd.f32 0.0, %v1120
      %v1122 = vpop.f32.mrb[0].mxu0
      %v1123 = vpop.f32.mrb[0].mxu0
      %v1124 = vadd.f32 0.0, %v1123
      %v1125 = vpop.f32.mrb[0].mxu0
      %1126 = vmatprep.mubr.bf16.mxu0 0
      %1127 = vmatmul.mubr.bf16.gmra.mrb[0].mxu0 %v767
      %v1128 = vpop.f32.mrb[0].mxu0
      %v1129 = vadd.f32 0.0, %v1128
      %v1130 = vpop.f32.mrb[0].mxu0
      %v1131 = vpop.f32.mrb[0].mxu0
      %v1132 = vadd.f32 0.0, %v1131
      %v1133 = vpop.f32.mrb[0].mxu0
      %1134 = vmatprep.mubr.bf16.mxu0 0
      %1135 = vmatmul.mubr.bf16.gmra.mrb[0].mxu0 %v770
      %v1136 = vpop.f32.mrb[0].mxu0
      %v1137 = vadd.f32 0.0, %v1136
      %v1138 = vpop.f32.mrb[0].mxu0
      %v1139 = vpop.f32.mrb[0].mxu0
      %v1140 = vadd.f32 0.0, %v1139
      %v1141 = vpop.f32.mrb[0].mxu0
      %1142 = vmatprep.mubr.bf16.mxu0 0
      %1143 = vmatmul.mubr.bf16.gmra.mrb[0].mxu0 %v773
      %v1144 = vpop.f32.mrb[0].mxu0
      %v1145 = vadd.f32 0.0, %v1144
      %v1146 = vpop.f32.mrb[0].mxu0
      %v1147 = vpop.f32.mrb[0].mxu0
      %v1148 = vadd.f32 0.0, %v1147
      %v1149 = vpop.f32.mrb[0].mxu0
      %1150 = vmatprep.mubr.bf16.mxu0 0
      %1151 = vmatmul.mubr.bf16.gmra.mrb[0].mxu0 %v776
      %v1152 = vpop.f32.mrb[0].mxu0
      %v1153 = vadd.f32 0.0, %v1152
      %v1154 = vpop.f32.mrb[0].mxu0
      %v1155 = vpop.f32.mrb[0].mxu0
      %v1156 = vadd.f32 0.0, %v1155
      %v1157 = vpop.f32.mrb[0].mxu0
      %1158 = vdwg.mxu0
      %v1167 = vunpack.c.l.b16 %v1021
      %v1168 = vunpack.c.l.b16 %v1022
      %v1169 = vunpack.c.l.b16 %v1023
      %v1170 = vunpack.c.l.b16 %v1024
      %v1171 = vunpack.c.l.b16 %v1025
      %v1172 = vunpack.c.l.b16 %v1026
      %v1173 = vunpack.c.l.b16 %v1027
      %v1174 = vunpack.c.l.b16 %v1028
      %v1175 = vpack.c.b16 %v1168, %v1167
      %v1176 = vpack.c.b16 %v1170, %v1169
      %v1177 = vpack.c.b16 %v1172, %v1171
      %v1178 = vpack.c.b16 %v1174, %v1173
      %1183 = vmatprep.subr.bf16.mxu0 0
      %1184 = vmatpush1.bf16.msra.mxu0 %v1175
      %1185 = vmatprep.subr.bf16.mxu0 0
      %1186 = vmatpush1.bf16.msra.mxu0 %v1176
      %1187 = vmatprep.subr.bf16.mxu0 0
      %1188 = vmatpush1.bf16.msra.mxu0 %v1177
      %1189 = vmatprep.subr.bf16.mxu0 0
      %1190 = vmatpush1.bf16.msra.mxu0 %v1178
      %1191 = vmatprep.subr.bf16.mxu0 0
      %1192 = vmatpush1.bf16.msra.mxu0 0
      %1193 = vmatprep.subr.bf16.mxu0 0
      %1194 = vmatpush1.bf16.msra.mxu0 0
      %1195 = vmatprep.subr.bf16.mxu0 0
      %1196 = vmatpush1.bf16.msra.mxu0 0
      %1197 = vmatprep.subr.bf16.mxu0 0
      %1198 = vmatpush1.bf16.msra.mxu0 0
      %1199 = vmatprep.subr.bf16.mxu0 0
      %1200 = vmatpush1.bf16.msra.mxu0 0
      %1201 = vmatprep.subr.bf16.mxu0 0
      %1202 = vmatpush1.bf16.msra.mxu0 0
      %1203 = vmatprep.subr.bf16.mxu0 0
      %1204 = vmatpush1.bf16.msra.mxu0 0
      %1205 = vmatprep.subr.bf16.mxu0 0
      %1206 = vmatpush1.bf16.msra.mxu0 0
      %1207 = vmatprep.subr.bf16.mxu0 0
      %1208 = vmatpush1.bf16.msra.mxu0 0
      %1209 = vmatprep.subr.bf16.mxu0 0
      %1210 = vmatpush1.bf16.msra.mxu0 0
      %1211 = vmatprep.subr.bf16.mxu0 0
      %1212 = vmatpush1.bf16.msra.mxu0 0
      %1213 = vmatprep.subr.bf16.mxu0 0
      %1214 = vmatpush1.bf16.msra.mxu0 0
      %1215 = vmatprep.mubr.bf16.mxu0 0
      %1216 = vmatmul.mubr.bf16.gmra.mrb[0].mxu0 %v900
      %v1217 = vpop.f32.mrb[0].mxu0
      %v1218 = vadd.f32 %v1097, %v1217
      %v1219 = vpop.f32.mrb[0].mxu0
      %v1220 = vpop.f32.mrb[0].mxu0
      %v1221 = vadd.f32 %v1100, %v1220
      %v1222 = vpop.f32.mrb[0].mxu0
      %1223 = vmatprep.mubr.bf16.mxu0 0
      %1224 = vmatmul.mubr.bf16.gmra.mrb[0].mxu0 %v903
      %v1225 = vpop.f32.mrb[0].mxu0
      %v1226 = vadd.f32 %v1105, %v1225
      %v1227 = vpop.f32.mrb[0].mxu0
      %v1228 = vpop.f32.mrb[0].mxu0
      %v1229 = vadd.f32 %v1108, %v1228
      %v1230 = vpop.f32.mrb[0].mxu0
      %1231 = vmatprep.mubr.bf16.mxu0 0
      %1232 = vmatmul.mubr.bf16.gmra.mrb[0].mxu0 %v906
      %v1233 = vpop.f32.mrb[0].mxu0
      %v1234 = vadd.f32 %v1113, %v1233
      %v1235 = vpop.f32.mrb[0].mxu0
      %v1236 = vpop.f32.mrb[0].mxu0
      %v1237 = vadd.f32 %v1116, %v1236
      %v1238 = vpop.f32.mrb[0].mxu0
      %1239 = vmatprep.mubr.bf16.mxu0 0
      %1240 = vmatmul.mubr.bf16.gmra.mrb[0].mxu0 %v909
      %v1241 = vpop.f32.mrb[0].mxu0
      %v1242 = vadd.f32 %v1121, %v1241
      %v1243 = vpop.f32.mrb[0].mxu0
      %v1244 = vpop.f32.mrb[0].mxu0
      %v1245 = vadd.f32 %v1124, %v1244
      %v1246 = vpop.f32.mrb[0].mxu0
      %1247 = vmatprep.mubr.bf16.mxu0 0
      %1248 = vmatmul.mubr.bf16.gmra.mrb[0].mxu0 %v912
      %v1249 = vpop.f32.mrb[0].mxu0
      %v1250 = vadd.f32 %v1129, %v1249
      %v1251 = vpop.f32.mrb[0].mxu0
      %v1252 = vpop.f32.mrb[0].mxu0
      %v1253 = vadd.f32 %v1132, %v1252
      %v1254 = vpop.f32.mrb[0].mxu0
      %1255 = vmatprep.mubr.bf16.mxu0 0
      %1256 = vmatmul.mubr.bf16.gmra.mrb[0].mxu0 %v915
      %v1257 = vpop.f32.mrb[0].mxu0
      %v1258 = vadd.f32 %v1137, %v1257
      %v1259 = vpop.f32.mrb[0].mxu0
      %v1260 = vpop.f32.mrb[0].mxu0
      %v1261 = vadd.f32 %v1140, %v1260
      %v1262 = vpop.f32.mrb[0].mxu0
      %1263 = vmatprep.mubr.bf16.mxu0 0
      %1264 = vmatmul.mubr.bf16.gmra.mrb[0].mxu0 %v918
      %v1265 = vpop.f32.mrb[0].mxu0
      %v1266 = vadd.f32 %v1145, %v1265
      %v1267 = vpop.f32.mrb[0].mxu0
      %v1268 = vpop.f32.mrb[0].mxu0
      %v1269 = vadd.f32 %v1148, %v1268
      %v1270 = vpop.f32.mrb[0].mxu0
      %1271 = vmatprep.mubr.bf16.mxu0 0
      %1272 = vmatmul.mubr.bf16.gmra.mrb[0].mxu0 %v921
      %v1273 = vpop.f32.mrb[0].mxu0
      %v1274 = vadd.f32 %v1153, %v1273
      %v1275 = vpop.f32.mrb[0].mxu0
      %v1276 = vpop.f32.mrb[0].mxu0
      %v1277 = vadd.f32 %v1156, %v1276
      %v1278 = vpop.f32.mrb[0].mxu0
      %1279 = vdwg.mxu0
      %v1280 = vpack.c.bf16 %v961, %v958
      %v1281 = vpack.c.bf16 %v969, %v966
      %v1282 = vpack.c.bf16 %v977, %v974
      %v1283 = vpack.c.bf16 %v985, %v982
      %v1284 = vpack.c.bf16 %v993, %v990
      %v1285 = vpack.c.bf16 %v1001, %v998
      %v1286 = vpack.c.bf16 %v1009, %v1006
      %v1287 = vpack.c.bf16 %v1017, %v1014
      %v1288 = vld [vmem:[%s476] sm:$0xf]
      %v1289 = vld [vmem:[%s476 + $0x4] sm:$0xf]
      %v1290 = vld [vmem:[%s476 + $0x8] sm:$0xf]
      %v1291 = vld [vmem:[%s476 + $0xc] sm:$0xf]
      %v1292 = vld [vmem:[%s476 + $0x10] sm:$0xf]
      %v1293 = vld [vmem:[%s476 + $0x14] sm:$0xf]
      %v1294 = vld [vmem:[%s476 + $0x18] sm:$0xf]
      %v1295 = vld [vmem:[%s476 + $0x1c] sm:$0xf]
      %v1296 = vld [vmem:[%s479] sm:$0x1]
      %v1298 = vlaneseq
      %v1299 = vshrl.u32 %v1298, 7
      %v1300 = vsub.s32 0, %v1299
      %v1301 = vrot.slane %v1296, %v1300
      %v1311 = vunpack.c.l.b16 %v1288
      %v1312 = vunpack.c.l.b16 %v1289
      %v1313 = vunpack.c.l.b16 %v1290
      %v1314 = vunpack.c.l.b16 %v1291
      %v1315 = vunpack.c.l.b16 %v1292
      %v1316 = vunpack.c.l.b16 %v1293
      %v1317 = vunpack.c.l.b16 %v1294
      %v1318 = vunpack.c.l.b16 %v1295
      %v1319 = vpack.c.b16 %v1312, %v1311
      %v1320 = vpack.c.b16 %v1314, %v1313
      %v1321 = vpack.c.b16 %v1316, %v1315
      %v1322 = vpack.c.b16 %v1318, %v1317
      %v1328 = vsel %vm753, %v1280, 0
      %v1331 = vsel %vm753, %v1281, 0
      %v1334 = vsel %vm753, %v1282, 0
      %v1337 = vsel %vm753, %v1283, 0
      %v1340 = vsel %vm753, %v1284, 0
      %v1343 = vsel %vm753, %v1285, 0
      %v1346 = vsel %vm753, %v1286, 0
      %v1349 = vsel %vm753, %v1287, 0
      %1351 = vmatprep.subr.bf16.mxu0 0
      %1352 = vmatpush1.bf16.msra.mxu0 %v1319
      %1353 = vmatprep.subr.bf16.mxu0 0
      %1354 = vmatpush1.bf16.msra.mxu0 %v1320
      %1355 = vmatprep.subr.bf16.mxu0 0
      %1356 = vmatpush1.bf16.msra.mxu0 %v1321
      %1357 = vmatprep.subr.bf16.mxu0 0
      %1358 = vmatpush1.bf16.msra.mxu0 %v1322
      %1359 = vmatprep.subr.bf16.mxu0 0
      %1360 = vmatpush1.bf16.msra.mxu0 0
      %1361 = vmatprep.subr.bf16.mxu0 0
      %1362 = vmatpush1.bf16.msra.mxu0 0
      %1363 = vmatprep.subr.bf16.mxu0 0
      %1364 = vmatpush1.bf16.msra.mxu0 0
      %1365 = vmatprep.subr.bf16.mxu0 0
      %1366 = vmatpush1.bf16.msra.mxu0 0
      %1367 = vmatprep.subr.bf16.mxu0 0
      %1368 = vmatpush1.bf16.msra.mxu0 0
      %1369 = vmatprep.subr.bf16.mxu0 0
      %1370 = vmatpush1.bf16.msra.mxu0 0
      %1371 = vmatprep.subr.bf16.mxu0 0
      %1372 = vmatpush1.bf16.msra.mxu0 0
      %1373 = vmatprep.subr.bf16.mxu0 0
      %1374 = vmatpush1.bf16.msra.mxu0 0
      %1375 = vmatprep.subr.bf16.mxu0 0
      %1376 = vmatpush1.bf16.msra.mxu0 0
      %1377 = vmatprep.subr.bf16.mxu0 0
      %1378 = vmatpush1.bf16.msra.mxu0 0
      %1379 = vmatprep.subr.bf16.mxu0 0
      %1380 = vmatpush1.bf16.msra.mxu0 0
      %1381 = vmatprep.subr.bf16.mxu0 0
      %1382 = vmatpush1.bf16.msra.mxu0 0
      %1383 = vmatprep.mubr.bf16.mxu0 0
      %1384 = vmatmul.mubr.bf16.gmra.mrb[0].mxu0 %v1328
      %v1385 = vpop.f32.mrb[0].mxu0
      %v1386 = vadd.f32 %v1301, %v1385
      %v1387 = vpop.f32.mrb[0].mxu0
      %v1388 = vpop.f32.mrb[0].mxu0
      %v1389 = vadd.f32 %v1301, %v1388
      %v1390 = vpop.f32.mrb[0].mxu0
      %1391 = vmatprep.mubr.bf16.mxu0 0
      %1392 = vmatmul.mubr.bf16.gmra.mrb[0].mxu0 %v1331
      %v1393 = vpop.f32.mrb[0].mxu0
      %v1394 = vadd.f32 %v1301, %v1393
      %v1395 = vpop.f32.mrb[0].mxu0
      %v1396 = vpop.f32.mrb[0].mxu0
      %v1397 = vadd.f32 %v1301, %v1396
      %v1398 = vpop.f32.mrb[0].mxu0
      %1399 = vmatprep.mubr.bf16.mxu0 0
      %1400 = vmatmul.mubr.bf16.gmra.mrb[0].mxu0 %v1334
      %v1401 = vpop.f32.mrb[0].mxu0
      %v1402 = vadd.f32 %v1301, %v1401
      %v1403 = vpop.f32.mrb[0].mxu0
      %v1404 = vpop.f32.mrb[0].mxu0
      %v1405 = vadd.f32 %v1301, %v1404
      %v1406 = vpop.f32.mrb[0].mxu0
      %1407 = vmatprep.mubr.bf16.mxu0 0
      %1408 = vmatmul.mubr.bf16.gmra.mrb[0].mxu0 %v1337
      %v1409 = vpop.f32.mrb[0].mxu0
      %v1410 = vadd.f32 %v1301, %v1409
      %v1411 = vpop.f32.mrb[0].mxu0
      %v1412 = vpop.f32.mrb[0].mxu0
      %v1413 = vadd.f32 %v1301, %v1412
      %v1414 = vpop.f32.mrb[0].mxu0
      %1415 = vmatprep.mubr.bf16.mxu0 0
      %1416 = vmatmul.mubr.bf16.gmra.mrb[0].mxu0 %v1340
      %v1417 = vpop.f32.mrb[0].mxu0
      %v1418 = vadd.f32 %v1301, %v1417
      %v1419 = vpop.f32.mrb[0].mxu0
      %v1420 = vpop.f32.mrb[0].mxu0
      %v1421 = vadd.f32 %v1301, %v1420
      %v1422 = vpop.f32.mrb[0].mxu0
      %1423 = vmatprep.mubr.bf16.mxu0 0
      %1424 = vmatmul.mubr.bf16.gmra.mrb[0].mxu0 %v1343
      %v1425 = vpop.f32.mrb[0].mxu0
      %v1426 = vadd.f32 %v1301, %v1425
      %v1427 = vpop.f32.mrb[0].mxu0
      %v1428 = vpop.f32.mrb[0].mxu0
      %v1429 = vadd.f32 %v1301, %v1428
      %v1430 = vpop.f32.mrb[0].mxu0
      %1431 = vmatprep.mubr.bf16.mxu0 0
      %1432 = vmatmul.mubr.bf16.gmra.mrb[0].mxu0 %v1346
      %v1433 = vpop.f32.mrb[0].mxu0
      %v1434 = vadd.f32 %v1301, %v1433
      %v1435 = vpop.f32.mrb[0].mxu0
      %v1436 = vpop.f32.mrb[0].mxu0
      %v1437 = vadd.f32 %v1301, %v1436
      %v1438 = vpop.f32.mrb[0].mxu0
      %1439 = vmatprep.mubr.bf16.mxu0 0
      %1440 = vmatmul.mubr.bf16.gmra.mrb[0].mxu0 %v1349
      %v1441 = vpop.f32.mrb[0].mxu0
      %v1442 = vadd.f32 %v1301, %v1441
      %v1443 = vpop.f32.mrb[0].mxu0
      %v1444 = vpop.f32.mrb[0].mxu0
      %v1445 = vadd.f32 %v1301, %v1444
      %v1446 = vpop.f32.mrb[0].mxu0
      %1447 = vdwg.mxu0
      %v1448 = vmax.f32 %v1386, 0.0
      %v1449 = vmax.f32 %v1389, 0.0
      %v1450 = vmax.f32 %v1394, 0.0
      %v1451 = vmax.f32 %v1397, 0.0
      %v1452 = vmax.f32 %v1402, 0.0
      %v1453 = vmax.f32 %v1405, 0.0
      %v1454 = vmax.f32 %v1410, 0.0
      %v1455 = vmax.f32 %v1413, 0.0
      %v1456 = vmax.f32 %v1418, 0.0
      %v1457 = vmax.f32 %v1421, 0.0
      %v1458 = vmax.f32 %v1426, 0.0
      %v1459 = vmax.f32 %v1429, 0.0
      %v1460 = vmax.f32 %v1434, 0.0
      %v1461 = vmax.f32 %v1437, 0.0
      %v1462 = vmax.f32 %v1442, 0.0
      %v1463 = vmax.f32 %v1445, 0.0
      %v1464 = vpack.c.bf16 %v1449, %v1448
      %v1465 = vpack.c.bf16 %v1451, %v1450
      %v1466 = vpack.c.bf16 %v1453, %v1452
      %v1467 = vpack.c.bf16 %v1455, %v1454
      %v1468 = vpack.c.bf16 %v1457, %v1456
      %v1469 = vpack.c.bf16 %v1459, %v1458
      %v1470 = vpack.c.bf16 %v1461, %v1460
      %v1471 = vpack.c.bf16 %v1463, %v1462
      %v1472 = vld [vmem:[%s488] sm:$0x3]
      %v1473 = vld [vmem:[%s484] sm:$0xf]
      %v1474 = vld [vmem:[%s484 + $0x4] sm:$0xf]
      %v1475 = vld [vmem:[%s484 + $0x8] sm:$0xf]
      %v1476 = vld [vmem:[%s484 + $0xc] sm:$0xf]
      %v1477 = vld [vmem:[%s484 + $0x10] sm:$0xf]
      %v1478 = vld [vmem:[%s484 + $0x14] sm:$0xf]
      %v1479 = vld [vmem:[%s484 + $0x18] sm:$0xf]
      %v1480 = vld [vmem:[%s484 + $0x1c] sm:$0xf]
      %v1481 = vld [vmem:[%s484 + $0x20] sm:$0xf]
      %v1482 = vld [vmem:[%s484 + $0x24] sm:$0xf]
      %v1483 = vld [vmem:[%s484 + $0x28] sm:$0xf]
      %v1484 = vld [vmem:[%s484 + $0x2c] sm:$0xf]
      %v1485 = vld [vmem:[%s484 + $0x30] sm:$0xf]
      %v1486 = vld [vmem:[%s484 + $0x34] sm:$0xf]
      %v1487 = vld [vmem:[%s484 + $0x38] sm:$0xf]
      %v1488 = vld [vmem:[%s484 + $0x3c] sm:$0xf]
      %v1489 = vlaneseq
      %v1490 = vshrl.u32 %v1489, 7
      %v1491 = vsub.s32 0, %v1490
      %v1492 = vrot.slane %v1472, %v1491
      %v1509 = vunpack.c.l.b16 %v1473
      %v1510 = vunpack.c.l.b16 %v1474
      %v1511 = vunpack.c.l.b16 %v1475
      %v1512 = vunpack.c.l.b16 %v1476
      %v1513 = vunpack.c.l.b16 %v1477
      %v1514 = vunpack.c.l.b16 %v1478
      %v1515 = vunpack.c.l.b16 %v1479
      %v1516 = vunpack.c.l.b16 %v1480
      %v1517 = vunpack.c.l.b16 %v1481
      %v1518 = vunpack.c.l.b16 %v1482
      %v1519 = vunpack.c.l.b16 %v1483
      %v1520 = vunpack.c.l.b16 %v1484
      %v1521 = vunpack.c.l.b16 %v1485
      %v1522 = vunpack.c.l.b16 %v1486
      %v1523 = vunpack.c.l.b16 %v1487
      %v1524 = vunpack.c.l.b16 %v1488
      %v1525 = vpack.c.b16 %v1510, %v1509
      %v1526 = vpack.c.b16 %v1512, %v1511
      %v1527 = vpack.c.b16 %v1514, %v1513
      %v1528 = vpack.c.b16 %v1516, %v1515
      %v1529 = vpack.c.b16 %v1518, %v1517
      %v1530 = vpack.c.b16 %v1520, %v1519
      %v1531 = vpack.c.b16 %v1522, %v1521
      %v1532 = vpack.c.b16 %v1524, %v1523
      %1541 = vmatprep.subr.bf16.mxu0 0
      %1542 = vmatpush1.bf16.msra.mxu0 %v1525
      %1543 = vmatprep.subr.bf16.mxu0 0
      %1544 = vmatpush1.bf16.msra.mxu0 %v1526
      %1545 = vmatprep.subr.bf16.mxu0 0
      %1546 = vmatpush1.bf16.msra.mxu0 %v1527
      %1547 = vmatprep.subr.bf16.mxu0 0
      %1548 = vmatpush1.bf16.msra.mxu0 %v1528
      %1549 = vmatprep.subr.bf16.mxu0 0
      %1550 = vmatpush1.bf16.msra.mxu0 %v1529
      %1551 = vmatprep.subr.bf16.mxu0 0
      %1552 = vmatpush1.bf16.msra.mxu0 %v1530
      %1553 = vmatprep.subr.bf16.mxu0 0
      %1554 = vmatpush1.bf16.msra.mxu0 %v1531
      %1555 = vmatprep.subr.bf16.mxu0 0
      %1556 = vmatpush1.bf16.msra.mxu0 %v1532
      %1557 = vmatprep.subr.bf16.mxu0 0
      %1558 = vmatpush1.bf16.msra.mxu0 0
      %1559 = vmatprep.subr.bf16.mxu0 0
      %1560 = vmatpush1.bf16.msra.mxu0 0
      %1561 = vmatprep.subr.bf16.mxu0 0
      %1562 = vmatpush1.bf16.msra.mxu0 0
      %1563 = vmatprep.subr.bf16.mxu0 0
      %1564 = vmatpush1.bf16.msra.mxu0 0
      %1565 = vmatprep.subr.bf16.mxu0 0
      %1566 = vmatpush1.bf16.msra.mxu0 0
      %1567 = vmatprep.subr.bf16.mxu0 0
      %1568 = vmatpush1.bf16.msra.mxu0 0
      %1569 = vmatprep.subr.bf16.mxu0 0
      %1570 = vmatpush1.bf16.msra.mxu0 0
      %1571 = vmatprep.subr.bf16.mxu0 0
      %1572 = vmatpush1.bf16.msra.mxu0 0
      %1573 = vmatprep.mubr.bf16.mxu0 0
      %1574 = vmatmul.mubr.bf16.gmra.mrb[0].mxu0 %v1464
      %v1575 = vpop.f32.mrb[0].mxu0
      %v1576 = vadd.f32 %v1492, %v1575
      %v1577 = vpop.f32.mrb[0].mxu0
      %v1578 = vpop.f32.mrb[0].mxu0
      %v1579 = vadd.f32 %v1492, %v1578
      %v1580 = vpop.f32.mrb[0].mxu0
      %1581 = vmatprep.mubr.bf16.mxu0 0
      %1582 = vmatmul.mubr.bf16.gmra.mrb[0].mxu0 %v1465
      %v1583 = vpop.f32.mrb[0].mxu0
      %v1584 = vadd.f32 %v1492, %v1583
      %v1585 = vpop.f32.mrb[0].mxu0
      %v1586 = vpop.f32.mrb[0].mxu0
      %v1587 = vadd.f32 %v1492, %v1586
      %v1588 = vpop.f32.mrb[0].mxu0
      %1589 = vmatprep.mubr.bf16.mxu0 0
      %1590 = vmatmul.mubr.bf16.gmra.mrb[0].mxu0 %v1466
      %v1591 = vpop.f32.mrb[0].mxu0
      %v1592 = vadd.f32 %v1492, %v1591
      %v1593 = vpop.f32.mrb[0].mxu0
      %v1594 = vpop.f32.mrb[0].mxu0
      %v1595 = vadd.f32 %v1492, %v1594
      %v1596 = vpop.f32.mrb[0].mxu0
      %1597 = vmatprep.mubr.bf16.mxu0 0
      %1598 = vmatmul.mubr.bf16.gmra.mrb[0].mxu0 %v1467
      %v1599 = vpop.f32.mrb[0].mxu0
      %v1600 = vadd.f32 %v1492, %v1599
      %v1601 = vpop.f32.mrb[0].mxu0
      %v1602 = vpop.f32.mrb[0].mxu0
      %v1603 = vadd.f32 %v1492, %v1602
      %v1604 = vpop.f32.mrb[0].mxu0
      %1605 = vmatprep.mubr.bf16.mxu0 0
      %1606 = vmatmul.mubr.bf16.gmra.mrb[0].mxu0 %v1468
      %v1607 = vpop.f32.mrb[0].mxu0
      %v1608 = vadd.f32 %v1492, %v1607
      %v1609 = vpop.f32.mrb[0].mxu0
      %v1610 = vpop.f32.mrb[0].mxu0
      %v1611 = vadd.f32 %v1492, %v1610
      %v1612 = vpop.f32.mrb[0].mxu0
      %1613 = vmatprep.mubr.bf16.mxu0 0
      %1614 = vmatmul.mubr.bf16.gmra.mrb[0].mxu0 %v1469
      %v1615 = vpop.f32.mrb[0].mxu0
      %v1616 = vadd.f32 %v1492, %v1615
      %v1617 = vpop.f32.mrb[0].mxu0
      %v1618 = vpop.f32.mrb[0].mxu0
      %v1619 = vadd.f32 %v1492, %v1618
      %v1620 = vpop.f32.mrb[0].mxu0
      %1621 = vmatprep.mubr.bf16.mxu0 0
      %1622 = vmatmul.mubr.bf16.gmra.mrb[0].mxu0 %v1470
      %v1623 = vpop.f32.mrb[0].mxu0
      %v1624 = vadd.f32 %v1492, %v1623
      %v1625 = vpop.f32.mrb[0].mxu0
      %v1626 = vpop.f32.mrb[0].mxu0
      %v1627 = vadd.f32 %v1492, %v1626
      %v1628 = vpop.f32.mrb[0].mxu0
      %1629 = vmatprep.mubr.bf16.mxu0 0
      %1630 = vmatmul.mubr.bf16.gmra.mrb[0].mxu0 %v1471
      %v1631 = vpop.f32.mrb[0].mxu0
      %v1632 = vadd.f32 %v1492, %v1631
      %v1633 = vpop.f32.mrb[0].mxu0
      %v1634 = vpop.f32.mrb[0].mxu0
      %v1635 = vadd.f32 %v1492, %v1634
      %v1636 = vpop.f32.mrb[0].mxu0
      %1637 = vdwg.mxu0
      %v1638 = vadd.f32 %v1576, 2.0
      %v1639 = vadd.f32 %v1579, 2.0
      %v1640 = vadd.f32 %v1584, 2.0
      %v1641 = vadd.f32 %v1587, 2.0
      %v1642 = vadd.f32 %v1592, 2.0
      %v1643 = vadd.f32 %v1595, 2.0
      %v1644 = vadd.f32 %v1600, 2.0
      %v1645 = vadd.f32 %v1603, 2.0
      %v1646 = vadd.f32 %v1608, 2.0
      %v1647 = vadd.f32 %v1611, 2.0
      %v1648 = vadd.f32 %v1616, 2.0
      %v1649 = vadd.f32 %v1619, 2.0
      %v1650 = vadd.f32 %v1624, 2.0
      %v1651 = vadd.f32 %v1627, 2.0
      %v1652 = vadd.f32 %v1632, 2.0
      %v1653 = vadd.f32 %v1635, 2.0
      %s1654 = scalar_lea.vmem %s484, 64
      %v1655 = vld [vmem:[%s1654] sm:$0xf]
      %v1656 = vld [vmem:[%s1654 + $0x4] sm:$0xf]
      %v1657 = vld [vmem:[%s1654 + $0x8] sm:$0xf]
      %v1658 = vld [vmem:[%s1654 + $0xc] sm:$0xf]
      %v1659 = vld [vmem:[%s1654 + $0x10] sm:$0xf]
      %v1660 = vld [vmem:[%s1654 + $0x14] sm:$0xf]
      %v1661 = vld [vmem:[%s1654 + $0x18] sm:$0xf]
      %v1662 = vld [vmem:[%s1654 + $0x1c] sm:$0xf]
      %v1663 = vld [vmem:[%s1654 + $0x20] sm:$0xf]
      %v1664 = vld [vmem:[%s1654 + $0x24] sm:$0xf]
      %v1665 = vld [vmem:[%s1654 + $0x28] sm:$0xf]
      %v1666 = vld [vmem:[%s1654 + $0x2c] sm:$0xf]
      %v1667 = vld [vmem:[%s1654 + $0x30] sm:$0xf]
      %v1668 = vld [vmem:[%s1654 + $0x34] sm:$0xf]
      %v1669 = vld [vmem:[%s1654 + $0x38] sm:$0xf]
      %v1670 = vld [vmem:[%s1654 + $0x3c] sm:$0xf]
      %v1671 = vlaneseq
      %v1672 = vshrl.u32 %v1671, 7
      %v1673 = vsub.s32 1, %v1672
      %v1674 = vrot.slane %v1472, %v1673
      %v1691 = vunpack.c.l.b16 %v1655
      %v1692 = vunpack.c.l.b16 %v1656
      %v1693 = vunpack.c.l.b16 %v1657
      %v1694 = vunpack.c.l.b16 %v1658
      %v1695 = vunpack.c.l.b16 %v1659
      %v1696 = vunpack.c.l.b16 %v1660
      %v1697 = vunpack.c.l.b16 %v1661
      %v1698 = vunpack.c.l.b16 %v1662
      %v1699 = vunpack.c.l.b16 %v1663
      %v1700 = vunpack.c.l.b16 %v1664
      %v1701 = vunpack.c.l.b16 %v1665
      %v1702 = vunpack.c.l.b16 %v1666
      %v1703 = vunpack.c.l.b16 %v1667
      %v1704 = vunpack.c.l.b16 %v1668
      %v1705 = vunpack.c.l.b16 %v1669
      %v1706 = vunpack.c.l.b16 %v1670
      %v1707 = vpack.c.b16 %v1692, %v1691
      %v1708 = vpack.c.b16 %v1694, %v1693
      %v1709 = vpack.c.b16 %v1696, %v1695
      %v1710 = vpack.c.b16 %v1698, %v1697
      %v1711 = vpack.c.b16 %v1700, %v1699
      %v1712 = vpack.c.b16 %v1702, %v1701
      %v1713 = vpack.c.b16 %v1704, %v1703
      %v1714 = vpack.c.b16 %v1706, %v1705
      %1723 = vmatprep.subr.bf16.mxu0 0
      %1724 = vmatpush1.bf16.msra.mxu0 %v1707
      %1725 = vmatprep.subr.bf16.mxu0 0
      %1726 = vmatpush1.bf16.msra.mxu0 %v1708
      %1727 = vmatprep.subr.bf16.mxu0 0
      %1728 = vmatpush1.bf16.msra.mxu0 %v1709
      %1729 = vmatprep.subr.bf16.mxu0 0
      %1730 = vmatpush1.bf16.msra.mxu0 %v1710
      %1731 = vmatprep.subr.bf16.mxu0 0
      %1732 = vmatpush1.bf16.msra.mxu0 %v1711
      %1733 = vmatprep.subr.bf16.mxu0 0
      %1734 = vmatpush1.bf16.msra.mxu0 %v1712
      %1735 = vmatprep.subr.bf16.mxu0 0
      %1736 = vmatpush1.bf16.msra.mxu0 %v1713
      %1737 = vmatprep.subr.bf16.mxu0 0
      %1738 = vmatpush1.bf16.msra.mxu0 %v1714
      %1739 = vmatprep.subr.bf16.mxu0 0
      %1740 = vmatpush1.bf16.msra.mxu0 0
      %1741 = vmatprep.subr.bf16.mxu0 0
      %1742 = vmatpush1.bf16.msra.mxu0 0
      %1743 = vmatprep.subr.bf16.mxu0 0
      %1744 = vmatpush1.bf16.msra.mxu0 0
      %1745 = vmatprep.subr.bf16.mxu0 0
      %1746 = vmatpush1.bf16.msra.mxu0 0
      %1747 = vmatprep.subr.bf16.mxu0 0
      %1748 = vmatpush1.bf16.msra.mxu0 0
      %1749 = vmatprep.subr.bf16.mxu0 0
      %1750 = vmatpush1.bf16.msra.mxu0 0
      %1751 = vmatprep.subr.bf16.mxu0 0
      %1752 = vmatpush1.bf16.msra.mxu0 0
      %1753 = vmatprep.subr.bf16.mxu0 0
      %1754 = vmatpush1.bf16.msra.mxu0 0
      %1755 = vmatprep.mubr.bf16.mxu0 0
      %1756 = vmatmul.mubr.bf16.gmra.mrb[0].mxu0 %v1464
      %v1757 = vpop.f32.mrb[0].mxu0
      %v1758 = vadd.f32 %v1674, %v1757
      %v1759 = vpop.f32.mrb[0].mxu0
      %v1760 = vpop.f32.mrb[0].mxu0
      %v1761 = vadd.f32 %v1674, %v1760
      %v1762 = vpop.f32.mrb[0].mxu0
      %1763 = vmatprep.mubr.bf16.mxu0 0
      %1764 = vmatmul.mubr.bf16.gmra.mrb[0].mxu0 %v1465
      %v1765 = vpop.f32.mrb[0].mxu0
      %v1766 = vadd.f32 %v1674, %v1765
      %v1767 = vpop.f32.mrb[0].mxu0
      %v1768 = vpop.f32.mrb[0].mxu0
      %v1769 = vadd.f32 %v1674, %v1768
      %v1770 = vpop.f32.mrb[0].mxu0
      %1771 = vmatprep.mubr.bf16.mxu0 0
      %1772 = vmatmul.mubr.bf16.gmra.mrb[0].mxu0 %v1466
      %v1773 = vpop.f32.mrb[0].mxu0
      %v1774 = vadd.f32 %v1674, %v1773
      %v1775 = vpop.f32.mrb[0].mxu0
      %v1776 = vpop.f32.mrb[0].mxu0
      %v1777 = vadd.f32 %v1674, %v1776
      %v1778 = vpop.f32.mrb[0].mxu0
      %1779 = vmatprep.mubr.bf16.mxu0 0
      %1780 = vmatmul.mubr.bf16.gmra.mrb[0].mxu0 %v1467
      %v1781 = vpop.f32.mrb[0].mxu0
      %v1782 = vadd.f32 %v1674, %v1781
      %v1783 = vpop.f32.mrb[0].mxu0
      %v1784 = vpop.f32.mrb[0].mxu0
      %v1785 = vadd.f32 %v1674, %v1784
      %v1786 = vpop.f32.mrb[0].mxu0
      %1787 = vmatprep.mubr.bf16.mxu0 0
      %1788 = vmatmul.mubr.bf16.gmra.mrb[0].mxu0 %v1468
      %v1789 = vpop.f32.mrb[0].mxu0
      %v1790 = vadd.f32 %v1674, %v1789
      %v1791 = vpop.f32.mrb[0].mxu0
      %v1792 = vpop.f32.mrb[0].mxu0
      %v1793 = vadd.f32 %v1674, %v1792
      %v1794 = vpop.f32.mrb[0].mxu0
      %1795 = vmatprep.mubr.bf16.mxu0 0
      %1796 = vmatmul.mubr.bf16.gmra.mrb[0].mxu0 %v1469
      %v1797 = vpop.f32.mrb[0].mxu0
      %v1798 = vadd.f32 %v1674, %v1797
      %v1799 = vpop.f32.mrb[0].mxu0
      %v1800 = vpop.f32.mrb[0].mxu0
      %v1801 = vadd.f32 %v1674, %v1800
      %v1802 = vpop.f32.mrb[0].mxu0
      %1803 = vmatprep.mubr.bf16.mxu0 0
      %1804 = vmatmul.mubr.bf16.gmra.mrb[0].mxu0 %v1470
      %v1805 = vpop.f32.mrb[0].mxu0
      %v1806 = vadd.f32 %v1674, %v1805
      %v1807 = vpop.f32.mrb[0].mxu0
      %v1808 = vpop.f32.mrb[0].mxu0
      %v1809 = vadd.f32 %v1674, %v1808
      %v1810 = vpop.f32.mrb[0].mxu0
      %1811 = vmatprep.mubr.bf16.mxu0 0
      %1812 = vmatmul.mubr.bf16.gmra.mrb[0].mxu0 %v1471
      %v1813 = vpop.f32.mrb[0].mxu0
      %v1814 = vadd.f32 %v1674, %v1813
      %v1815 = vpop.f32.mrb[0].mxu0
      %v1816 = vpop.f32.mrb[0].mxu0
      %v1817 = vadd.f32 %v1674, %v1816
      %v1818 = vpop.f32.mrb[0].mxu0
      %1819 = vdwg.mxu0
      %v1820 = vsub.f32 0.0, %v1638
      %v1821 = vsub.f32 0.0, %v1639
      %v1822 = vsub.f32 0.0, %v1640
      %v1823 = vsub.f32 0.0, %v1641
      %v1824 = vsub.f32 0.0, %v1642
      %v1825 = vsub.f32 0.0, %v1643
      %v1826 = vsub.f32 0.0, %v1644
      %v1827 = vsub.f32 0.0, %v1645
      %v1828 = vsub.f32 0.0, %v1646
      %v1829 = vsub.f32 0.0, %v1647
      %v1830 = vsub.f32 0.0, %v1648
      %v1831 = vsub.f32 0.0, %v1649
      %v1832 = vsub.f32 0.0, %v1650
      %v1833 = vsub.f32 0.0, %v1651
      %v1834 = vsub.f32 0.0, %v1652
      %v1835 = vsub.f32 0.0, %v1653
      %v1836 = vmax.f32 %v1820, 0.0
      %v1837 = vmax.f32 %v1821, 0.0
      %v1838 = vmax.f32 %v1822, 0.0
      %v1839 = vmax.f32 %v1823, 0.0
      %v1840 = vmax.f32 %v1824, 0.0
      %v1841 = vmax.f32 %v1825, 0.0
      %v1842 = vmax.f32 %v1826, 0.0
      %v1843 = vmax.f32 %v1827, 0.0
      %v1844 = vmax.f32 %v1828, 0.0
      %v1845 = vmax.f32 %v1829, 0.0
      %v1846 = vmax.f32 %v1830, 0.0
      %v1847 = vmax.f32 %v1831, 0.0
      %v1848 = vmax.f32 %v1832, 0.0
      %v1849 = vmax.f32 %v1833, 0.0
      %v1850 = vmax.f32 %v1834, 0.0
      %v1851 = vmax.f32 %v1835, 0.0
      %v1852 = vand.u32 2147483647, %v1638
      %v1853 = vand.u32 2147483647, %v1639
      %v1854 = vand.u32 2147483647, %v1640
      %v1855 = vand.u32 2147483647, %v1641
      %v1856 = vand.u32 2147483647, %v1642
      %v1857 = vand.u32 2147483647, %v1643
      %v1858 = vand.u32 2147483647, %v1644
      %v1859 = vand.u32 2147483647, %v1645
      %v1860 = vand.u32 2147483647, %v1646
      %v1861 = vand.u32 2147483647, %v1647
      %v1862 = vand.u32 2147483647, %v1648
      %v1863 = vand.u32 2147483647, %v1649
      %v1864 = vand.u32 2147483647, %v1650
      %v1865 = vand.u32 2147483647, %v1651
      %v1866 = vand.u32 2147483647, %v1652
      %v1867 = vand.u32 2147483647, %v1653
      %v1868 = vsub.f32 0.0, %v1852
      %v1869 = vsub.f32 0.0, %v1853
      %v1870 = vsub.f32 0.0, %v1854
      %v1871 = vsub.f32 0.0, %v1855
      %v1872 = vsub.f32 0.0, %v1856
      %v1873 = vsub.f32 0.0, %v1857
      %v1874 = vsub.f32 0.0, %v1858
      %v1875 = vsub.f32 0.0, %v1859
      %v1876 = vsub.f32 0.0, %v1860
      %v1877 = vsub.f32 0.0, %v1861
      %v1878 = vsub.f32 0.0, %v1862
      %v1879 = vsub.f32 0.0, %v1863
      %v1880 = vsub.f32 0.0, %v1864
      %v1881 = vsub.f32 0.0, %v1865
      %v1882 = vsub.f32 0.0, %v1866
      %v1883 = vsub.f32 0.0, %v1867
      %v1884 = vmul.f32 %v1868, 1.442695
      %v1885 = vpow.pop %v1884
      %v1886 = vmul.f32 %v1869, 1.442695
      %v1887 = vpow.pop %v1886
      %v1888 = vmul.f32 %v1870, 1.442695
      %v1889 = vpow.pop %v1888
      %v1890 = vmul.f32 %v1871, 1.442695
      %v1891 = vpow.pop %v1890
      %v1892 = vmul.f32 %v1872, 1.442695
      %v1893 = vpow.pop %v1892
      %v1894 = vmul.f32 %v1873, 1.442695
      %v1895 = vpow.pop %v1894
      %v1896 = vmul.f32 %v1874, 1.442695
      %v1897 = vpow.pop %v1896
      %v1898 = vmul.f32 %v1875, 1.442695
      %v1899 = vpow.pop %v1898
      %v1900 = vmul.f32 %v1876, 1.442695
      %v1901 = vpow.pop %v1900
      %v1902 = vmul.f32 %v1877, 1.442695
      %v1903 = vpow.pop %v1902
      %v1904 = vmul.f32 %v1878, 1.442695
      %v1905 = vpow.pop %v1904
      %v1906 = vmul.f32 %v1879, 1.442695
      %v1907 = vpow.pop %v1906
      %v1908 = vmul.f32 %v1880, 1.442695
      %v1909 = vpow.pop %v1908
      %v1910 = vmul.f32 %v1881, 1.442695
      %v1911 = vpow.pop %v1910
      %v1912 = vmul.f32 %v1882, 1.442695
      %v1913 = vpow.pop %v1912
      %v1914 = vmul.f32 %v1883, 1.442695
      %v1915 = vpow.pop %v1914
      %v1916 = vadd.f32 %v1885, 1.0
      %v1917 = vadd.f32 %v1887, 1.0
      %v1918 = vadd.f32 %v1889, 1.0
      %v1919 = vadd.f32 %v1891, 1.0
      %v1920 = vadd.f32 %v1893, 1.0
      %v1921 = vadd.f32 %v1895, 1.0
      %v1922 = vadd.f32 %v1897, 1.0
      %v1923 = vadd.f32 %v1899, 1.0
      %v1924 = vadd.f32 %v1901, 1.0
      %v1925 = vadd.f32 %v1903, 1.0
      %v1926 = vadd.f32 %v1905, 1.0
      %v1927 = vadd.f32 %v1907, 1.0
      %v1928 = vadd.f32 %v1909, 1.0
      %v1929 = vadd.f32 %v1911, 1.0
      %v1930 = vadd.f32 %v1913, 1.0
      %v1931 = vadd.f32 %v1915, 1.0
      %v1932 = vlog2.pop %v1916
      %v1933 = vmul.f32 %v1932, 0.6931472
      %v1934 = vlog2.pop %v1917
      %v1935 = vmul.f32 %v1934, 0.6931472
      %v1936 = vlog2.pop %v1918
      %v1937 = vmul.f32 %v1936, 0.6931472
      %v1938 = vlog2.pop %v1919
      %v1939 = vmul.f32 %v1938, 0.6931472
      %v1940 = vlog2.pop %v1920
      %v1941 = vmul.f32 %v1940, 0.6931472
      %v1942 = vlog2.pop %v1921
      %v1943 = vmul.f32 %v1942, 0.6931472
      %v1944 = vlog2.pop %v1922
      %v1945 = vmul.f32 %v1944, 0.6931472
      %v1946 = vlog2.pop %v1923
      %v1947 = vmul.f32 %v1946, 0.6931472
      %v1948 = vlog2.pop %v1924
      %v1949 = vmul.f32 %v1948, 0.6931472
      %v1950 = vlog2.pop %v1925
      %v1951 = vmul.f32 %v1950, 0.6931472
      %v1952 = vlog2.pop %v1926
      %v1953 = vmul.f32 %v1952, 0.6931472
      %v1954 = vlog2.pop %v1927
      %v1955 = vmul.f32 %v1954, 0.6931472
      %v1956 = vlog2.pop %v1928
      %v1957 = vmul.f32 %v1956, 0.6931472
      %v1958 = vlog2.pop %v1929
      %v1959 = vmul.f32 %v1958, 0.6931472
      %v1960 = vlog2.pop %v1930
      %v1961 = vmul.f32 %v1960, 0.6931472
      %v1962 = vlog2.pop %v1931
      %v1963 = vmul.f32 %v1962, 0.6931472
      %v1964 = vadd.f32 %v1836, %v1933
      %v1965 = vadd.f32 %v1837, %v1935
      %v1966 = vadd.f32 %v1838, %v1937
      %v1967 = vadd.f32 %v1839, %v1939
      %v1968 = vadd.f32 %v1840, %v1941
      %v1969 = vadd.f32 %v1841, %v1943
      %v1970 = vadd.f32 %v1842, %v1945
      %v1971 = vadd.f32 %v1843, %v1947
      %v1972 = vadd.f32 %v1844, %v1949
      %v1973 = vadd.f32 %v1845, %v1951
      %v1974 = vadd.f32 %v1846, %v1953
      %v1975 = vadd.f32 %v1847, %v1955
      %v1976 = vadd.f32 %v1848, %v1957
      %v1977 = vadd.f32 %v1849, %v1959
      %v1978 = vadd.f32 %v1850, %v1961
      %v1979 = vadd.f32 %v1851, %v1963
      %v1980 = vsub.f32 0.0, %v1964
      %v1981 = vsub.f32 0.0, %v1965
      %v1982 = vsub.f32 0.0, %v1966
      %v1983 = vsub.f32 0.0, %v1967
      %v1984 = vsub.f32 0.0, %v1968
      %v1985 = vsub.f32 0.0, %v1969
      %v1986 = vsub.f32 0.0, %v1970
      %v1987 = vsub.f32 0.0, %v1971
      %v1988 = vsub.f32 0.0, %v1972
      %v1989 = vsub.f32 0.0, %v1973
      %v1990 = vsub.f32 0.0, %v1974
      %v1991 = vsub.f32 0.0, %v1975
      %v1992 = vsub.f32 0.0, %v1976
      %v1993 = vsub.f32 0.0, %v1977
      %v1994 = vsub.f32 0.0, %v1978
      %v1995 = vsub.f32 0.0, %v1979
      %v1996 = vmul.f32 %v1980, 1.442695
      %v1997 = vpow.pop %v1996
      %v1998 = vmul.f32 %v1981, 1.442695
      %v1999 = vpow.pop %v1998
      %v2000 = vmul.f32 %v1982, 1.442695
      %v2001 = vpow.pop %v2000
      %v2002 = vmul.f32 %v1983, 1.442695
      %v2003 = vpow.pop %v2002
      %v2004 = vmul.f32 %v1984, 1.442695
      %v2005 = vpow.pop %v2004
      %v2006 = vmul.f32 %v1985, 1.442695
      %v2007 = vpow.pop %v2006
      %v2008 = vmul.f32 %v1986, 1.442695
      %v2009 = vpow.pop %v2008
      %v2010 = vmul.f32 %v1987, 1.442695
      %v2011 = vpow.pop %v2010
      %v2012 = vmul.f32 %v1988, 1.442695
      %v2013 = vpow.pop %v2012
      %v2014 = vmul.f32 %v1989, 1.442695
      %v2015 = vpow.pop %v2014
      %v2016 = vmul.f32 %v1990, 1.442695
      %v2017 = vpow.pop %v2016
      %v2018 = vmul.f32 %v1991, 1.442695
      %v2019 = vpow.pop %v2018
      %v2020 = vmul.f32 %v1992, 1.442695
      %v2021 = vpow.pop %v2020
      %v2022 = vmul.f32 %v1993, 1.442695
      %v2023 = vpow.pop %v2022
      %v2024 = vmul.f32 %v1994, 1.442695
      %v2025 = vpow.pop %v2024
      %v2026 = vmul.f32 %v1995, 1.442695
      %v2027 = vpow.pop %v2026
      %2028 = vst.msk [vmem:[#allocation2] sm:$0xff] %vm753, %v958
      %2029 = vst.msk [vmem:[#allocation2 + $0x8] sm:$0xff] %vm753, %v961
      %2030 = vst.msk [vmem:[#allocation2 + $0x10] sm:$0xff] %vm753, %v966
      %2031 = vst.msk [vmem:[#allocation2 + $0x18] sm:$0xff] %vm753, %v969
      %2032 = vst.msk [vmem:[#allocation2 + $0x20] sm:$0xff] %vm753, %v974
      %2033 = vst.msk [vmem:[#allocation2 + $0x28] sm:$0xff] %vm753, %v977
      %2034 = vst.msk [vmem:[#allocation2 + $0x30] sm:$0xff] %vm753, %v982
      %2035 = vst.msk [vmem:[#allocation2 + $0x38] sm:$0xff] %vm753, %v985
      %2036 = vst.msk [vmem:[#allocation2 + $0x40] sm:$0xff] %vm753, %v990
      %2037 = vst.msk [vmem:[#allocation2 + $0x48] sm:$0xff] %vm753, %v993
      %2038 = vst.msk [vmem:[#allocation2 + $0x50] sm:$0xff] %vm753, %v998
      %2039 = vst.msk [vmem:[#allocation2 + $0x58] sm:$0xff] %vm753, %v1001
      %2040 = vst.msk [vmem:[#allocation2 + $0x60] sm:$0xff] %vm753, %v1006
      %2041 = vst.msk [vmem:[#allocation2 + $0x68] sm:$0xff] %vm753, %v1009
      %2042 = vst.msk [vmem:[#allocation2 + $0x70] sm:$0xff] %vm753, %v1014
      %2043 = vst.msk [vmem:[#allocation2 + $0x78] sm:$0xff] %vm753, %v1017
      %v2044 = vadd.f32 %v1218, %v1758
      %v2045 = vadd.f32 %v1221, %v1761
      %v2046 = vadd.f32 %v1226, %v1766
      %v2047 = vadd.f32 %v1229, %v1769
      %v2048 = vadd.f32 %v1234, %v1774
      %v2049 = vadd.f32 %v1237, %v1777
      %v2050 = vadd.f32 %v1242, %v1782
      %v2051 = vadd.f32 %v1245, %v1785
      %v2052 = vadd.f32 %v1250, %v1790
      %v2053 = vadd.f32 %v1253, %v1793
      %v2054 = vadd.f32 %v1258, %v1798
      %v2055 = vadd.f32 %v1261, %v1801
      %v2056 = vadd.f32 %v1266, %v1806
      %v2057 = vadd.f32 %v1269, %v1809
      %v2058 = vadd.f32 %v1274, %v1814
      %v2059 = vadd.f32 %v1277, %v1817
      %v2060 = vmul.f32 %v2044, %v1997
      %v2061 = vmul.f32 %v2045, %v1999
      %v2062 = vmul.f32 %v2046, %v2001
      %v2063 = vmul.f32 %v2047, %v2003
      %v2064 = vmul.f32 %v2048, %v2005
      %v2065 = vmul.f32 %v2049, %v2007
      %v2066 = vmul.f32 %v2050, %v2009
      %v2067 = vmul.f32 %v2051, %v2011
      %v2068 = vmul.f32 %v2052, %v2013
      %v2069 = vmul.f32 %v2053, %v2015
      %v2070 = vmul.f32 %v2054, %v2017
      %v2071 = vmul.f32 %v2055, %v2019
      %v2072 = vmul.f32 %v2056, %v2021
      %v2073 = vmul.f32 %v2057, %v2023
      %v2074 = vmul.f32 %v2058, %v2025
      %v2075 = vmul.f32 %v2059, %v2027
      %2076 = vst.msk [vmem:[#allocation3] sm:$0xff] %vm753, %v2060
      %2077 = vst.msk [vmem:[#allocation3 + $0x8] sm:$0xff] %vm753, %v2061
      %2078 = vst.msk [vmem:[#allocation3 + $0x10] sm:$0xff] %vm753, %v2062
      %2079 = vst.msk [vmem:[#allocation3 + $0x18] sm:$0xff] %vm753, %v2063
      %2080 = vst.msk [vmem:[#allocation3 + $0x20] sm:$0xff] %vm753, %v2064
      %2081 = vst.msk [vmem:[#allocation3 + $0x28] sm:$0xff] %vm753, %v2065
      %2082 = vst.msk [vmem:[#allocation3 + $0x30] sm:$0xff] %vm753, %v2066
      %2083 = vst.msk [vmem:[#allocation3 + $0x38] sm:$0xff] %vm753, %v2067
      %2084 = vst.msk [vmem:[#allocation3 + $0x40] sm:$0xff] %vm753, %v2068
      %2085 = vst.msk [vmem:[#allocation3 + $0x48] sm:$0xff] %vm753, %v2069
      %2086 = vst.msk [vmem:[#allocation3 + $0x50] sm:$0xff] %vm753, %v2070
      %2087 = vst.msk [vmem:[#allocation3 + $0x58] sm:$0xff] %vm753, %v2071
      %2088 = vst.msk [vmem:[#allocation3 + $0x60] sm:$0xff] %vm753, %v2072
      %2089 = vst.msk [vmem:[#allocation3 + $0x68] sm:$0xff] %vm753, %v2073
      %2090 = vst.msk [vmem:[#allocation3 + $0x70] sm:$0xff] %vm753, %v2074
      %2091 = vst.msk [vmem:[#allocation3 + $0x78] sm:$0xff] %vm753, %v2075
      %v2092 = vld [vmem:[#allocation4] sm:$0xff]
      %v2093 = vld [vmem:[#allocation4 + $0x8] sm:$0xff]
      %v2094 = vld [vmem:[#allocation4 + $0x10] sm:$0xff]
      %v2095 = vld [vmem:[#allocation4 + $0x18] sm:$0xff]
      %v2096 = vld [vmem:[#allocation4 + $0x20] sm:$0xff]
      %v2097 = vld [vmem:[#allocation4 + $0x28] sm:$0xff]
      %v2098 = vld [vmem:[#allocation4 + $0x30] sm:$0xff]
      %v2099 = vld [vmem:[#allocation4 + $0x38] sm:$0xff]
      %v2100 = vld [vmem:[#allocation4 + $0x40] sm:$0xff]
      %v2101 = vld [vmem:[#allocation4 + $0x48] sm:$0xff]
      %v2102 = vld [vmem:[#allocation4 + $0x50] sm:$0xff]
      %v2103 = vld [vmem:[#allocation4 + $0x58] sm:$0xff]
      %v2104 = vld [vmem:[#allocation4 + $0x60] sm:$0xff]
      %v2105 = vld [vmem:[#allocation4 + $0x68] sm:$0xff]
      %v2106 = vld [vmem:[#allocation4 + $0x70] sm:$0xff]
      %v2107 = vld [vmem:[#allocation4 + $0x78] sm:$0xff]
      %v2108 = vsel %vm753, %v1980, 0.0
      %2109 = vadd.xlane.f32.xlu0 %v2108
      %v2110 = vpop.xlane.xlu0 %2109
      %v2111 = vsel %vm753, %v1981, 0.0
      %2112 = vadd.xlane.f32.xlu0 %v2111
      %v2113 = vpop.xlane.xlu0 %2112
      %v2114 = vsel %vm753, %v1982, 0.0
      %2115 = vadd.xlane.f32.xlu0 %v2114
      %v2116 = vpop.xlane.xlu0 %2115
      %v2117 = vsel %vm753, %v1983, 0.0
      %2118 = vadd.xlane.f32.xlu0 %v2117
      %v2119 = vpop.xlane.xlu0 %2118
      %v2120 = vsel %vm753, %v1984, 0.0
      %2121 = vadd.xlane.f32.xlu0 %v2120
      %v2122 = vpop.xlane.xlu0 %2121
      %v2123 = vsel %vm753, %v1985, 0.0
      %2124 = vadd.xlane.f32.xlu0 %v2123
      %v2125 = vpop.xlane.xlu0 %2124
      %v2126 = vsel %vm753, %v1986, 0.0
      %2127 = vadd.xlane.f32.xlu0 %v2126
      %v2128 = vpop.xlane.xlu0 %2127
      %v2129 = vsel %vm753, %v1987, 0.0
      %2130 = vadd.xlane.f32.xlu0 %v2129
      %v2131 = vpop.xlane.xlu0 %2130
      %v2132 = vsel %vm753, %v1988, 0.0
      %2133 = vadd.xlane.f32.xlu0 %v2132
      %v2134 = vpop.xlane.xlu0 %2133
      %v2135 = vsel %vm753, %v1989, 0.0
      %2136 = vadd.xlane.f32.xlu0 %v2135
      %v2137 = vpop.xlane.xlu0 %2136
      %v2138 = vsel %vm753, %v1990, 0.0
      %2139 = vadd.xlane.f32.xlu0 %v2138
      %v2140 = vpop.xlane.xlu0 %2139
      %v2141 = vsel %vm753, %v1991, 0.0
      %2142 = vadd.xlane.f32.xlu0 %v2141
      %v2143 = vpop.xlane.xlu0 %2142
      %v2144 = vsel %vm753, %v1992, 0.0
      %2145 = vadd.xlane.f32.xlu0 %v2144
      %v2146 = vpop.xlane.xlu0 %2145
      %v2147 = vsel %vm753, %v1993, 0.0
      %2148 = vadd.xlane.f32.xlu0 %v2147
      %v2149 = vpop.xlane.xlu0 %2148
      %v2150 = vsel %vm753, %v1994, 0.0
      %2151 = vadd.xlane.f32.xlu0 %v2150
      %v2152 = vpop.xlane.xlu0 %2151
      %v2153 = vsel %vm753, %v1995, 0.0
      %2154 = vadd.xlane.f32.xlu0 %v2153
      %v2155 = vpop.xlane.xlu0 %2154
      %v2156 = vadd.f32 %v2092, %v2110
      %v2157 = vadd.f32 %v2093, %v2113
      %v2158 = vadd.f32 %v2094, %v2116
      %v2159 = vadd.f32 %v2095, %v2119
      %v2160 = vadd.f32 %v2096, %v2122
      %v2161 = vadd.f32 %v2097, %v2125
      %v2162 = vadd.f32 %v2098, %v2128
      %v2163 = vadd.f32 %v2099, %v2131
      %v2164 = vadd.f32 %v2100, %v2134
      %v2165 = vadd.f32 %v2101, %v2137
      %v2166 = vadd.f32 %v2102, %v2140
      %v2167 = vadd.f32 %v2103, %v2143
      %v2168 = vadd.f32 %v2104, %v2146
      %v2169 = vadd.f32 %v2105, %v2149
      %v2170 = vadd.f32 %v2106, %v2152
      %v2171 = vadd.f32 %v2107, %v2155
      %vm2172 = vcmask 7168
      %2173 = vst.msk [vmem:[#allocation4] sm:$0xff] %vm2172, %v2156
      %2174 = vst.msk [vmem:[#allocation4 + $0x8] sm:$0xff] %vm2172, %v2157
      %2175 = vst.msk [vmem:[#allocation4 + $0x10] sm:$0xff] %vm2172, %v2158
      %2176 = vst.msk [vmem:[#allocation4 + $0x18] sm:$0xff] %vm2172, %v2159
      %2177 = vst.msk [vmem:[#allocation4 + $0x20] sm:$0xff] %vm2172, %v2160
      %2178 = vst.msk [vmem:[#allocation4 + $0x28] sm:$0xff] %vm2172, %v2161
      %2179 = vst.msk [vmem:[#allocation4 + $0x30] sm:$0xff] %vm2172, %v2162
      %2180 = vst.msk [vmem:[#allocation4 + $0x38] sm:$0xff] %vm2172, %v2163
      %2181 = vst.msk [vmem:[#allocation4 + $0x40] sm:$0xff] %vm2172, %v2164
      %2182 = vst.msk [vmem:[#allocation4 + $0x48] sm:$0xff] %vm2172, %v2165
      %2183 = vst.msk [vmem:[#allocation4 + $0x50] sm:$0xff] %vm2172, %v2166
      %2184 = vst.msk [vmem:[#allocation4 + $0x58] sm:$0xff] %vm2172, %v2167
      %2185 = vst.msk [vmem:[#allocation4 + $0x60] sm:$0xff] %vm2172, %v2168
      %2186 = vst.msk [vmem:[#allocation4 + $0x68] sm:$0xff] %vm2172, %v2169
      %2187 = vst.msk [vmem:[#allocation4 + $0x70] sm:$0xff] %vm2172, %v2170
      %2188 = vst.msk [vmem:[#allocation4 + $0x78] sm:$0xff] %vm2172, %v2171
      %p2189 = scmp.eq.s32.totalorder %s25, 1
      // Predicated region
      $region61: #{tpu_custom_call.1} parent=55 // pred_check
        %p2190 = pneg %p2189
      $region62: #{tpu_custom_call.1} parent=55 // pred_check_branch
        %2192 = sbr.rel (%p2190) target = $region64
      $region63: #{tpu_custom_call.1} parent=55 // pred_region
        %v2193 = vld [vmem:[#allocation2] sm:$0xff]
        %v2194 = vld [vmem:[#allocation2 + $0x8] sm:$0xff]
        %v2195 = vld [vmem:[#allocation2 + $0x10] sm:$0xff]
        %v2196 = vld [vmem:[#allocation2 + $0x18] sm:$0xff]
        %v2197 = vld [vmem:[#allocation2 + $0x20] sm:$0xff]
        %v2198 = vld [vmem:[#allocation2 + $0x28] sm:$0xff]
        %v2199 = vld [vmem:[#allocation2 + $0x30] sm:$0xff]
        %v2200 = vld [vmem:[#allocation2 + $0x38] sm:$0xff]
        %v2201 = vld [vmem:[#allocation2 + $0x40] sm:$0xff]
        %v2202 = vld [vmem:[#allocation2 + $0x48] sm:$0xff]
        %v2203 = vld [vmem:[#allocation2 + $0x50] sm:$0xff]
        %v2204 = vld [vmem:[#allocation2 + $0x58] sm:$0xff]
        %v2205 = vld [vmem:[#allocation2 + $0x60] sm:$0xff]
        %v2206 = vld [vmem:[#allocation2 + $0x68] sm:$0xff]
        %v2207 = vld [vmem:[#allocation2 + $0x70] sm:$0xff]
        %v2208 = vld [vmem:[#allocation2 + $0x78] sm:$0xff]
        %v2209 = vmul.f32 %v2193, %v2193
        %v2210 = vmul.f32 %v2194, %v2194
        %v2211 = vmul.f32 %v2195, %v2195
        %v2212 = vmul.f32 %v2196, %v2196
        %v2213 = vmul.f32 %v2197, %v2197
        %v2214 = vmul.f32 %v2198, %v2198
        %v2215 = vmul.f32 %v2199, %v2199
        %v2216 = vmul.f32 %v2200, %v2200
        %v2217 = vmul.f32 %v2201, %v2201
        %v2218 = vmul.f32 %v2202, %v2202
        %v2219 = vmul.f32 %v2203, %v2203
        %v2220 = vmul.f32 %v2204, %v2204
        %v2221 = vmul.f32 %v2205, %v2205
        %v2222 = vmul.f32 %v2206, %v2206
        %v2223 = vmul.f32 %v2207, %v2207
        %v2224 = vmul.f32 %v2208, %v2208
        %v2225 = vsel %vm753, %v2209, 0.0
        %2226 = vadd.xlane.f32.xlu0 %v2225
        %v2227 = vpop.xlane.xlu0 %2226
        %v2228 = vsel %vm753, %v2210, 0.0
        %2229 = vadd.xlane.f32.xlu0 %v2228
        %v2230 = vpop.xlane.xlu0 %2229
        %v2231 = vsel %vm753, %v2211, 0.0
        %2232 = vadd.xlane.f32.xlu0 %v2231
        %v2233 = vpop.xlane.xlu0 %2232
        %v2234 = vsel %vm753, %v2212, 0.0
        %2235 = vadd.xlane.f32.xlu0 %v2234
        %v2236 = vpop.xlane.xlu0 %2235
        %v2237 = vsel %vm753, %v2213, 0.0
        %2238 = vadd.xlane.f32.xlu0 %v2237
        %v2239 = vpop.xlane.xlu0 %2238
        %v2240 = vsel %vm753, %v2214, 0.0
        %2241 = vadd.xlane.f32.xlu0 %v2240
        %v2242 = vpop.xlane.xlu0 %2241
        %v2243 = vsel %vm753, %v2215, 0.0
        %2244 = vadd.xlane.f32.xlu0 %v2243
        %v2245 = vpop.xlane.xlu0 %2244
        %v2246 = vsel %vm753, %v2216, 0.0
        %2247 = vadd.xlane.f32.xlu0 %v2246
        %v2248 = vpop.xlane.xlu0 %2247
        %v2249 = vsel %vm753, %v2217, 0.0
        %2250 = vadd.xlane.f32.xlu0 %v2249
        %v2251 = vpop.xlane.xlu0 %2250
        %v2252 = vsel %vm753, %v2218, 0.0
        %2253 = vadd.xlane.f32.xlu0 %v2252
        %v2254 = vpop.xlane.xlu0 %2253
        %v2255 = vsel %vm753, %v2219, 0.0
        %2256 = vadd.xlane.f32.xlu0 %v2255
        %v2257 = vpop.xlane.xlu0 %2256
        %v2258 = vsel %vm753, %v2220, 0.0
        %2259 = vadd.xlane.f32.xlu0 %v2258
        %v2260 = vpop.xlane.xlu0 %2259
        %v2261 = vsel %vm753, %v2221, 0.0
        %2262 = vadd.xlane.f32.xlu0 %v2261
        %v2263 = vpop.xlane.xlu0 %2262
        %v2264 = vsel %vm753, %v2222, 0.0
        %2265 = vadd.xlane.f32.xlu0 %v2264
        %v2266 = vpop.xlane.xlu0 %2265
        %v2267 = vsel %vm753, %v2223, 0.0
        %2268 = vadd.xlane.f32.xlu0 %v2267
        %v2269 = vpop.xlane.xlu0 %2268
        %v2270 = vsel %vm753, %v2224, 0.0
        %2271 = vadd.xlane.f32.xlu0 %v2270
        %v2272 = vpop.xlane.xlu0 %2271
        %v2273 = vld [vmem:[#allocation3] sm:$0xff]
        %v2274 = vld [vmem:[#allocation3 + $0x8] sm:$0xff]
        %v2275 = vld [vmem:[#allocation3 + $0x10] sm:$0xff]
        %v2276 = vld [vmem:[#allocation3 + $0x18] sm:$0xff]
        %v2277 = vld [vmem:[#allocation3 + $0x20] sm:$0xff]
        %v2278 = vld [vmem:[#allocation3 + $0x28] sm:$0xff]
        %v2279 = vld [vmem:[#allocation3 + $0x30] sm:$0xff]
        %v2280 = vld [vmem:[#allocation3 + $0x38] sm:$0xff]
        %v2281 = vld [vmem:[#allocation3 + $0x40] sm:$0xff]
        %v2282 = vld [vmem:[#allocation3 + $0x48] sm:$0xff]
        %v2283 = vld [vmem:[#allocation3 + $0x50] sm:$0xff]
        %v2284 = vld [vmem:[#allocation3 + $0x58] sm:$0xff]
        %v2285 = vld [vmem:[#allocation3 + $0x60] sm:$0xff]
        %v2286 = vld [vmem:[#allocation3 + $0x68] sm:$0xff]
        %v2287 = vld [vmem:[#allocation3 + $0x70] sm:$0xff]
        %v2288 = vld [vmem:[#allocation3 + $0x78] sm:$0xff]
        %v2289 = vmul.f32 %v2273, %v2273
        %v2290 = vmul.f32 %v2274, %v2274
        %v2291 = vmul.f32 %v2275, %v2275
        %v2292 = vmul.f32 %v2276, %v2276
        %v2293 = vmul.f32 %v2277, %v2277
        %v2294 = vmul.f32 %v2278, %v2278
        %v2295 = vmul.f32 %v2279, %v2279
        %v2296 = vmul.f32 %v2280, %v2280
        %v2297 = vmul.f32 %v2281, %v2281
        %v2298 = vmul.f32 %v2282, %v2282
        %v2299 = vmul.f32 %v2283, %v2283
        %v2300 = vmul.f32 %v2284, %v2284
        %v2301 = vmul.f32 %v2285, %v2285
        %v2302 = vmul.f32 %v2286, %v2286
        %v2303 = vmul.f32 %v2287, %v2287
        %v2304 = vmul.f32 %v2288, %v2288
        %v2305 = vsel %vm753, %v2289, 0.0
        %2306 = vadd.xlane.f32.xlu0 %v2305
        %v2307 = vpop.xlane.xlu0 %2306
        %v2308 = vsel %vm753, %v2290, 0.0
        %2309 = vadd.xlane.f32.xlu0 %v2308
        %v2310 = vpop.xlane.xlu0 %2309
        %v2311 = vsel %vm753, %v2291, 0.0
        %2312 = vadd.xlane.f32.xlu0 %v2311
        %v2313 = vpop.xlane.xlu0 %2312
        %v2314 = vsel %vm753, %v2292, 0.0
        %2315 = vadd.xlane.f32.xlu0 %v2314
        %v2316 = vpop.xlane.xlu0 %2315
        %v2317 = vsel %vm753, %v2293, 0.0
        %2318 = vadd.xlane.f32.xlu0 %v2317
        %v2319 = vpop.xlane.xlu0 %2318
        %v2320 = vsel %vm753, %v2294, 0.0
        %2321 = vadd.xlane.f32.xlu0 %v2320
        %v2322 = vpop.xlane.xlu0 %2321
        %v2323 = vsel %vm753, %v2295, 0.0
        %2324 = vadd.xlane.f32.xlu0 %v2323
        %v2325 = vpop.xlane.xlu0 %2324
        %v2326 = vsel %vm753, %v2296, 0.0
        %2327 = vadd.xlane.f32.xlu0 %v2326
        %v2328 = vpop.xlane.xlu0 %2327
        %v2329 = vsel %vm753, %v2297, 0.0
        %2330 = vadd.xlane.f32.xlu0 %v2329
        %v2331 = vpop.xlane.xlu0 %2330
        %v2332 = vsel %vm753, %v2298, 0.0
        %2333 = vadd.xlane.f32.xlu0 %v2332
        %v2334 = vpop.xlane.xlu0 %2333
        %v2335 = vsel %vm753, %v2299, 0.0
        %2336 = vadd.xlane.f32.xlu0 %v2335
        %v2337 = vpop.xlane.xlu0 %2336
        %v2338 = vsel %vm753, %v2300, 0.0
        %2339 = vadd.xlane.f32.xlu0 %v2338
        %v2340 = vpop.xlane.xlu0 %2339
        %v2341 = vsel %vm753, %v2301, 0.0
        %2342 = vadd.xlane.f32.xlu0 %v2341
        %v2343 = vpop.xlane.xlu0 %2342
        %v2344 = vsel %vm753, %v2302, 0.0
        %2345 = vadd.xlane.f32.xlu0 %v2344
        %v2346 = vpop.xlane.xlu0 %2345
        %v2347 = vsel %vm753, %v2303, 0.0
        %2348 = vadd.xlane.f32.xlu0 %v2347
        %v2349 = vpop.xlane.xlu0 %2348
        %v2350 = vsel %vm753, %v2304, 0.0
        %2351 = vadd.xlane.f32.xlu0 %v2350
        %v2352 = vpop.xlane.xlu0 %2351
        %v2353 = vadd.f32 %v2227, %v2307
        %v2354 = vadd.f32 %v2230, %v2310
        %v2355 = vadd.f32 %v2233, %v2313
        %v2356 = vadd.f32 %v2236, %v2316
        %v2357 = vadd.f32 %v2239, %v2319
        %v2358 = vadd.f32 %v2242, %v2322
        %v2359 = vadd.f32 %v2245, %v2325
        %v2360 = vadd.f32 %v2248, %v2328
        %v2361 = vadd.f32 %v2251, %v2331
        %v2362 = vadd.f32 %v2254, %v2334
        %v2363 = vadd.f32 %v2257, %v2337
        %v2364 = vadd.f32 %v2260, %v2340
        %v2365 = vadd.f32 %v2263, %v2343
        %v2366 = vadd.f32 %v2266, %v2346
        %v2367 = vadd.f32 %v2269, %v2349
        %v2368 = vadd.f32 %v2272, %v2352
        %v2369 = vmul.f32 %v2353, -0.5
        %v2370 = vmul.f32 %v2354, -0.5
        %v2371 = vmul.f32 %v2355, -0.5
        %v2372 = vmul.f32 %v2356, -0.5
        %v2373 = vmul.f32 %v2357, -0.5
        %v2374 = vmul.f32 %v2358, -0.5
        %v2375 = vmul.f32 %v2359, -0.5
        %v2376 = vmul.f32 %v2360, -0.5
        %v2377 = vmul.f32 %v2361, -0.5
        %v2378 = vmul.f32 %v2362, -0.5
        %v2379 = vmul.f32 %v2363, -0.5
        %v2380 = vmul.f32 %v2364, -0.5
        %v2381 = vmul.f32 %v2365, -0.5
        %v2382 = vmul.f32 %v2366, -0.5
        %v2383 = vmul.f32 %v2367, -0.5
        %v2384 = vmul.f32 %v2368, -0.5
        %v2385 = vld [vmem:[#allocation4] sm:$0xff]
        %v2386 = vld [vmem:[#allocation4 + $0x8] sm:$0xff]
        %v2387 = vld [vmem:[#allocation4 + $0x10] sm:$0xff]
        %v2388 = vld [vmem:[#allocation4 + $0x18] sm:$0xff]
        %v2389 = vld [vmem:[#allocation4 + $0x20] sm:$0xff]
        %v2390 = vld [vmem:[#allocation4 + $0x28] sm:$0xff]
        %v2391 = vld [vmem:[#allocation4 + $0x30] sm:$0xff]
        %v2392 = vld [vmem:[#allocation4 + $0x38] sm:$0xff]
        %v2393 = vld [vmem:[#allocation4 + $0x40] sm:$0xff]
        %v2394 = vld [vmem:[#allocation4 + $0x48] sm:$0xff]
        %v2395 = vld [vmem:[#allocation4 + $0x50] sm:$0xff]
        %v2396 = vld [vmem:[#allocation4 + $0x58] sm:$0xff]
        %v2397 = vld [vmem:[#allocation4 + $0x60] sm:$0xff]
        %v2398 = vld [vmem:[#allocation4 + $0x68] sm:$0xff]
        %v2399 = vld [vmem:[#allocation4 + $0x70] sm:$0xff]
        %v2400 = vld [vmem:[#allocation4 + $0x78] sm:$0xff]
        %v2401 = vadd.f32 %v2385, %v2369
        %v2402 = vadd.f32 %v2386, %v2370
        %v2403 = vadd.f32 %v2387, %v2371
        %v2404 = vadd.f32 %v2388, %v2372
        %v2405 = vadd.f32 %v2389, %v2373
        %v2406 = vadd.f32 %v2390, %v2374
        %v2407 = vadd.f32 %v2391, %v2375
        %v2408 = vadd.f32 %v2392, %v2376
        %v2409 = vadd.f32 %v2393, %v2377
        %v2410 = vadd.f32 %v2394, %v2378
        %v2411 = vadd.f32 %v2395, %v2379
        %v2412 = vadd.f32 %v2396, %v2380
        %v2413 = vadd.f32 %v2397, %v2381
        %v2414 = vadd.f32 %v2398, %v2382
        %v2415 = vadd.f32 %v2399, %v2383
        %v2416 = vadd.f32 %v2400, %v2384
        %2417 = vst.msk [vmem:[%s493] sm:$0xff] %vm2172, %v2401
        %2418 = vst.msk [vmem:[%s493 + $0x8] sm:$0xff] %vm2172, %v2402
        %2419 = vst.msk [vmem:[%s493 + $0x10] sm:$0xff] %vm2172, %v2403
        %2420 = vst.msk [vmem:[%s493 + $0x18] sm:$0xff] %vm2172, %v2404
        %2421 = vst.msk [vmem:[%s493 + $0x20] sm:$0xff] %vm2172, %v2405
        %2422 = vst.msk [vmem:[%s493 + $0x28] sm:$0xff] %vm2172, %v2406
        %2423 = vst.msk [vmem:[%s493 + $0x30] sm:$0xff] %vm2172, %v2407
        %2424 = vst.msk [vmem:[%s493 + $0x38] sm:$0xff] %vm2172, %v2408
        %2425 = vst.msk [vmem:[%s493 + $0x40] sm:$0xff] %vm2172, %v2409
        %2426 = vst.msk [vmem:[%s493 + $0x48] sm:$0xff] %vm2172, %v2410
        %2427 = vst.msk [vmem:[%s493 + $0x50] sm:$0xff] %vm2172, %v2411
        %2428 = vst.msk [vmem:[%s493 + $0x58] sm:$0xff] %vm2172, %v2412
        %2429 = vst.msk [vmem:[%s493 + $0x60] sm:$0xff] %vm2172, %v2413
        %2430 = vst.msk [vmem:[%s493 + $0x68] sm:$0xff] %vm2172, %v2414
        %2431 = vst.msk [vmem:[%s493 + $0x70] sm:$0xff] %vm2172, %v2415
        %2432 = vst.msk [vmem:[%s493 + $0x78] sm:$0xff] %vm2172, %v2416
      $region64: #{tpu_custom_call.1} parent=55 // pred_fallthru
        _
      %s2433 = smul.u32 16, %s24
      %p2434 = scmp.lt.s32.totalorder %s2433, 15
      %s2435 = scalar_select %p2434, %s2433, 15
      %s2436 = smul.addr %s2435, 8
      %s2437 = scalar_lea.vmem %s9, %s2436
      // Predicated region
      $region65: #{tpu_custom_call.1} parent=55 // pred_check
        %p2438 = pneg %p284
      $region66: #{tpu_custom_call.1} parent=55 // pred_check_branch
        %2440 = sbr.rel (%p2438) target = $region68
      $region67: #{tpu_custom_call.1} parent=55 // pred_region
        %s2441 = smul.u32 16, %s24
      $region68: #{tpu_custom_call.1} parent=55 // pred_fallthru
        _
      // Predicated region
      $region69: #{tpu_custom_call.1} parent=55 // pred_check
        %p2442 = pneg %p284
      $region70: #{tpu_custom_call.1} parent=55 // pred_check_branch
        %2444 = sbr.rel (%p2442) target = $region72
      $region71: #{tpu_custom_call.1} parent=55 // pred_region
        %s2445 = smul.u32 16, %s24
        %p2446 = scmp.lt.s32.totalorder %s2445, 15
        %s2447 = scalar_select %p2446, %s2445, 15
        %s2448 = smul.addr %s2447, 8
        %s2449 = scalar_lea.vmem %s9, %s2448
      $region72: #{tpu_custom_call.1} parent=55 // pred_fallthru
        _
    $region56: #{tpu_custom_call.1} parent=5 // pred_fallthru
      _
    %p2450 = scmp.le.s32.totalorder 2, %s15
    // Predicated region
    $region73: #{tpu_custom_call.1} parent=5 // pred_check
      %p2451 = pneg %p2450
    $region74: #{tpu_custom_call.1} parent=5 // pred_check_branch
      %2453 = sbr.rel (%p2451) target = $region76
    $region75: #{tpu_custom_call.1} parent=5 // pred_region
      %s2454 = ssub.s32 %s15, 2
    $region76: #{tpu_custom_call.1} parent=5 // pred_fallthru
      _
  $region6: #{tpu_custom_call.1} parent=0 // loop_footer
    %s19 = sadd.s32 1, %s15
  $region7: #{tpu_custom_call.1} parent=0 // loop_footer_branch
    %14 = sbr.rel target = $region3
  $region8: #{tpu_custom_call.1} parent=0 // loop_exit
    _

</llo_original>
